<compile_context>
chip_gen: v6e
topology: v6e:2x2x1
jax: 0.10.0
libtpu: 0.0.40
codegen_flags: <defaults>
</compile_context>

<pallas_src>
import functools

import jax
import jax.numpy as jnp
from jax import lax
from jax.experimental import pallas as pl
from jax.experimental.pallas import tpu as pltpu


# ------------------------------------------------------------------ helpers

def _round_up(x, m):
    return ((x + m - 1) // m) * m


def _choose_tb(B, tb_max=256):
    """Trajectories per grid step. Multiple of 8; >=2 grid steps once B >= 16."""
    if B >= 16:
        tb = _round_up(-(-B // 2), 8)     # ceil(B/2) rounded up -> grid >= 2 (v7x: 2 TCs)
    else:
        tb = _round_up(B, 8)
    return min(tb, tb_max)                # 256 fills the v6e/v7x MXU; 2 passes on v5e


# ------------------------------------------------------------------ kernel

def _task_encoder_kernel(s_ref, a_ref,
                         w1s_ref, w1a_ref, w2_ref, w3g_ref, whh_ref,
                         ow1_ref, ow2_ref, bias_ref,
                         o_ref, gates_ref):
    """One grid step == TB trajectories. Everything stays on-chip."""
    T, TB, _ = s_ref.shape
    H = whh_ref.shape[0]
    G = 4 * H
    mxu_dtype = w1s_ref.dtype             # bf16 or f32; set at param-build time

    # Packed biases (cuts operand count): [ b3g(4H) | b1(H) | b2(H) | ob1(H) | ob2(latent) ]
    b3g = bias_ref[:, 0:G]
    b1 = bias_ref[:, G:G + H]
    b2 = bias_ref[:, G + H:G + 2 * H]
    ob1 = bias_ref[:, G + 2 * H:G + 3 * H]
    ob2 = bias_ref[:, G + 3 * H:]

    # ---- sa_encoder MLP on all T*TB rows at once (time-major; reshape is
    #      layout-free because TB is a multiple of 8) --------------------------------
    x_s = s_ref[...].reshape(T * TB, s_ref.shape[-1]).astype(mxu_dtype)
    x_a = a_ref[...].reshape(T * TB, a_ref.shape[-1]).astype(mxu_dtype)
    # concat([s, a], -1) @ W1  ==  s @ W1[:sd] + a @ W1[sd:]   (no in-kernel concat)
    h = (jnp.dot(x_s, w1s_ref[...], preferred_element_type=jnp.float32)
         + jnp.dot(x_a, w1a_ref[...], preferred_element_type=jnp.float32)
         + b1)
    h = jnp.maximum(h, 0.0)
    h = jnp.dot(h.astype(mxu_dtype), w2_ref[...],
                preferred_element_type=jnp.float32) + b2
    h = jnp.maximum(h, 0.0)
    # Folded encoder-last-layer + LSTM input projection + biases: gate pre-activations
    # for every (t, trajectory) in one matmul.  Stored time-major in VMEM scratch so
    # the serial loop reads contiguous (TB, 4H) slabs.
    gates_ref[...] = (jnp.dot(h.astype(mxu_dtype), w3g_ref[...],
                              preferred_element_type=jnp.float32) + b3g
                      ).reshape(T, TB, G)

    # ---- LSTM recurrence (time-major) ----------------------------------------------
    whh = whh_ref[...]                    # (H, 4H) resident across all steps

    # t = 0: h_0 == 0 -> skip the h @ W_hh matmul and the f*c term entirely.
    g0 = gates_ref[0]                     # (TB, 4H), PyTorch gate order [i, f, g, o]
    sig0 = jax.nn.sigmoid(g0)             # one full-width EUP pass; slice afterwards
    c_t = sig0[:, 0 * H:1 * H] * jnp.tanh(g0[:, 2 * H:3 * H])
    h_t = sig0[:, 3 * H:4 * H] * jnp.tanh(c_t)

    def step(t, carry):
        h_prev, c_prev = carry
        gates = gates_ref[t] + jnp.dot(h_prev.astype(mxu_dtype), whh,
                                       preferred_element_type=jnp.float32)
        sig = jax.nn.sigmoid(gates)
        i_g = sig[:, 0 * H:1 * H]
        f_g = sig[:, 1 * H:2 * H]
        o_g = sig[:, 3 * H:4 * H]
        g_g = jnp.tanh(gates[:, 2 * H:3 * H])
        c_new = f_g * c_prev + i_g * g_g
        return o_g * jnp.tanh(c_new), c_new

    h_t, c_t = lax.fori_loop(1, T, step, (h_t, c_t), unroll=True)

    # ---- output projection on the final hidden state --------------------------------
    y = jnp.dot(h_t.astype(mxu_dtype), ow1_ref[...],
                preferred_element_type=jnp.float32) + ob1
    y = jnp.maximum(y, 0.0)
    y = jnp.dot(y.astype(mxu_dtype), ow2_ref[...],
                preferred_element_type=jnp.float32) + ob2
    o_ref[...] = y                        # (TB, latent) lane-dense block


# ------------------------------------------------------------------ wrapper

def task_encoder_forward(states, actions, params, *, tb_max=256):
    """states: (B, T, state_dim), actions: (B, T, action_dim) -> (B, latent)."""
    (w1s, w1a, w2, w3g, whh, ow1, ow2, bias_pack) = params
    B, T, sd = states.shape
    ad = actions.shape[-1]
    H = whh.shape[0]
    latent = ow2.shape[1]

    TB = _choose_tb(B, tb_max)
    Bp = _round_up(B, TB)
    grid_n = Bp // TB

    f32 = jnp.float32
    states = states.astype(f32)
    actions = actions.astype(f32)
    if Bp != B:
        pad = ((0, Bp - B), (0, 0), (0, 0))
        states = jnp.pad(states, pad)
        actions = jnp.pad(actions, pad)
    # Time-major layout so each recurrence step reads a contiguous (TB, 4H) slab.
    s_tm = jnp.transpose(states, (1, 0, 2))    # (T, Bp, sd)
    a_tm = jnp.transpose(actions, (1, 0, 2))   # (T, Bp, ad)

    def whole(x):
        nd = x.ndim
        return pl.BlockSpec(x.shape, lambda i, _nd=nd: (0,) * _nd)

    out = pl.pallas_call(
        _task_encoder_kernel,
        out_shape=jax.ShapeDtypeStruct((Bp, latent), f32),
        grid=(grid_n,),
        in_specs=[
            pl.BlockSpec((T, TB, sd), lambda i: (0, i, 0)),   # this block's trajectories
            pl.BlockSpec((T, TB, ad), lambda i: (0, i, 0)),
            whole(w1s), whole(w1a), whole(w2), whole(w3g),    # weights: constant index_map,
            whole(whh), whole(ow1), whole(ow2),               # stay resident in VMEM
            whole(bias_pack),
        ],
        out_specs=pl.BlockSpec((TB, latent), lambda i: (i, 0)),
        scratch_shapes=[pltpu.VMEM((T, TB, 4 * H), f32)],     # time-major gate pre-acts
        compiler_params=pltpu.CompilerParams(
            dimension_semantics=("parallel",),                # batch blocks -> both v7x TCs
        ),
    )(s_tm, a_tm, w1s, w1a, w2, w3g, whh, ow1, ow2, bias_pack)
    return out[:B]


# ------------------------------------------------------------------ module

class TaskEncoderPallas:
    """Pallas port of TaskEncoder. Weights stored as (in, out) so kernels do x @ W + b."""

    def __init__(self, state_dim, action_dim, latent_dim, hidden_dim=128,
                 key=None, mxu_dtype=jnp.float32):
        if key is None:
            key = jax.random.PRNGKey(0)
        self.state_dim = state_dim
        self.action_dim = action_dim
        self.latent_dim = latent_dim
        self.hidden_dim = hidden_dim
        self.mxu_dtype = mxu_dtype

        ks = jax.random.split(key, 12)

        def lin(kw, kb, fan_in, fan_out):
            bound = 1.0 / jnp.sqrt(fan_in)
            w = jax.random.uniform(kw, (fan_in, fan_out), jnp.float32, -bound, bound)
            b = jax.random.uniform(kb, (1, fan_out), jnp.float32, -bound, bound)
            return w, b

        in_dim = state_dim + action_dim
        # sa_encoder
        self.sa_w1, self.sa_b1 = lin(ks[0], ks[1], in_dim, hidden_dim)
        self.sa_w2, self.sa_b2 = lin(ks[2], ks[3], hidden_dim, hidden_dim)
        self.sa_w3, self.sa_b3 = lin(ks[4], ks[5], hidden_dim, latent_dim)
        # lstm (PyTorch: weight_ih (4H, L), weight_hh (4H, H), biases (4H,); gate order i,f,g,o)
        bound = 1.0 / jnp.sqrt(hidden_dim)
        k_lstm = jax.random.split(ks[6], 4)
        self.w_ih_t = jax.random.uniform(k_lstm[0], (latent_dim, 4 * hidden_dim),
                                         jnp.float32, -bound, bound)
        self.w_hh_t = jax.random.uniform(k_lstm[1], (hidden_dim, 4 * hidden_dim),
                                         jnp.float32, -bound, bound)
        b_ih = jax.random.uniform(k_lstm[2], (4 * hidden_dim,), jnp.float32, -bound, bound)
        b_hh = jax.random.uniform(k_lstm[3], (4 * hidden_dim,), jnp.float32, -bound, bound)
        self.lstm_b = (b_ih + b_hh).reshape(1, 4 * hidden_dim)
        # output_proj
        self.op_w1, self.op_b1 = lin(ks[7], ks[8], hidden_dim, hidden_dim)
        self.op_w2, self.op_b2 = lin(ks[9], ks[10], hidden_dim, latent_dim)

        # -------- precomputed kernel parameters (once, outside the hot path) ----------
        # Split first layer (no in-kernel concat), fold W3/b3 into the LSTM input
        # projection (all folding done in f32), then cast MXU operands once.
        w1_s = self.sa_w1[:state_dim]
        w1_a = self.sa_w1[state_dim:]
        w3g = self.sa_w3 @ self.w_ih_t                      # (hidden, 4H)
        b3g = self.sa_b3 @ self.w_ih_t + self.lstm_b        # (1, 4H)
        bias_pack = jnp.concatenate(                        # [b3g | b1 | b2 | ob1 | ob2]
            [b3g, self.sa_b1, self.sa_b2, self.op_b1, self.op_b2], axis=-1)
        md = mxu_dtype
        self.kernel_params = (w1_s.astype(md), w1_a.astype(md), self.sa_w2.astype(md),
                              w3g.astype(md), self.w_hh_t.astype(md),
                              self.op_w1.astype(md), self.op_w2.astype(md),
                              bias_pack.astype(jnp.float32))

    @functools.partial(jax.jit, static_argnums=0)
    def __call__(self, states, actions):
        states = states.astype(jnp.float32)
        actions = actions.astype(jnp.float32)
        return task_encoder_forward(states, actions, self.kernel_params)

    # Pure-JAX reference (mirrors PyTorch semantics, unfolded f32 weights).
    def reference(self, states, actions):
        B, T = states.shape[:2]
        sa = jnp.concatenate([states, actions], axis=-1).astype(jnp.float32)
        x = sa.reshape(B * T, -1)
        h = jax.nn.relu(x @ self.sa_w1 + self.sa_b1)
        h = jax.nn.relu(h @ self.sa_w2 + self.sa_b2)
        enc = (h @ self.sa_w3 + self.sa_b3).reshape(B, T, self.latent_dim)

        H = self.hidden_dim

        def step(carry, x_t):
            h_prev, c_prev = carry
            gates = x_t @ self.w_ih_t + h_prev @ self.w_hh_t + self.lstm_b
            i = jax.nn.sigmoid(gates[:, 0 * H:1 * H])
            f = jax.nn.sigmoid(gates[:, 1 * H:2 * H])
            g = jnp.tanh(gates[:, 2 * H:3 * H])
            o = jax.nn.sigmoid(gates[:, 3 * H:4 * H])
            c = f * c_prev + i * g
            h_new = o * jnp.tanh(c)
            return (h_new, c), None

        init = (jnp.zeros((B, H), jnp.float32), jnp.zeros((B, H), jnp.float32))
        (h_final, _), _ = lax.scan(step, init, jnp.transpose(enc, (1, 0, 2)))

        y = jax.nn.relu(h_final @ self.op_w1 + self.op_b1)
        return y @ self.op_w2 + self.op_b2


# ------------------------------------------------------------------ main

if __name__ == "__main__":
    batch, seq_len = 2, 8
    state_dim, action_dim, latent_dim, hidden_dim = 12, 4, 8, 32

    key = jax.random.PRNGKey(0)
    k_params, k_s, k_a = jax.random.split(key, 3)

    states = jax.random.normal(k_s, (batch, seq_len, state_dim), jnp.float32)
    actions = jax.random.normal(k_a, (batch, seq_len, action_dim), jnp.float32)

    # f32-MXU path: tight check against the pure-JAX reference.
    model = TaskEncoderPallas(state_dim, action_dim, latent_dim, hidden_dim,
                              key=k_params, mxu_dtype=jnp.float32)
    out = jax.block_until_ready(model(states, actions))
    assert out.shape == (batch, latent_dim), out.shape
    ref = jax.block_until_ready(model.reference(states, actions))
    assert jnp.allclose(out, ref, rtol=1e-3, atol=1e-4), (out, ref)

    # bf16-for-MXU path (perf option for v6e/v7x): f32 accumulation, looser tolerance.
    model_bf16 = TaskEncoderPallas(state_dim, action_dim, latent_dim, hidden_dim,
                                   key=k_params, mxu_dtype=jnp.bfloat16)
    out_bf16 = jax.block_until_ready(model_bf16(states, actions))
    assert out_bf16.shape == (batch, latent_dim), out_bf16.shape
    assert jnp.allclose(out_bf16, ref, rtol=5e-2, atol=5e-2), (out_bf16, ref)

    print("KERNEL_OK")
</pallas_src>

<mosaic_0001>
module attributes {stable_mosaic.version = 11 : i64} {
  func.func @_task_encoder_kernel(%arg0: i32, %arg1: memref<8x8x12xf32, #tpu.memory_space<vmem>>, %arg2: memref<8x8x4xf32, #tpu.memory_space<vmem>>, %arg3: memref<12x32xf32, #tpu.memory_space<vmem>>, %arg4: memref<4x32xf32, #tpu.memory_space<vmem>>, %arg5: memref<32x32xf32, #tpu.memory_space<vmem>>, %arg6: memref<32x128xf32, #tpu.memory_space<vmem>>, %arg7: memref<32x128xf32, #tpu.memory_space<vmem>>, %arg8: memref<32x32xf32, #tpu.memory_space<vmem>>, %arg9: memref<32x8xf32, #tpu.memory_space<vmem>>, %arg10: memref<1x232xf32, #tpu.memory_space<vmem>>, %arg11: memref<8x8xf32, #tpu.memory_space<vmem>>, %arg12: memref<8x8x128xf32, #tpu.memory_space<vmem>>) attributes {dimension_semantics = [#tpu.dimension_semantics<parallel>], iteration_bounds = array<i64: 1>, scalar_prefetch = 0 : i64, scratch_operands = 1 : i64, tpu.core_type = #tpu.core_type<tc>, window_params = [{transform_indices = @transform_0, window_bounds = array<i64: 8, 8, 12>}, {transform_indices = @transform_1, window_bounds = array<i64: 8, 8, 4>}, {pipeline_mode = #tpu.pipeline_mode<synchronous>, transform_indices = @transform_2, window_bounds = array<i64: 12, 32>}, {pipeline_mode = #tpu.pipeline_mode<synchronous>, transform_indices = @transform_3, window_bounds = array<i64: 4, 32>}, {pipeline_mode = #tpu.pipeline_mode<synchronous>, transform_indices = @transform_4, window_bounds = array<i64: 32, 32>}, {pipeline_mode = #tpu.pipeline_mode<synchronous>, transform_indices = @transform_5, window_bounds = array<i64: 32, 128>}, {pipeline_mode = #tpu.pipeline_mode<synchronous>, transform_indices = @transform_6, window_bounds = array<i64: 32, 128>}, {pipeline_mode = #tpu.pipeline_mode<synchronous>, transform_indices = @transform_7, window_bounds = array<i64: 32, 32>}, {pipeline_mode = #tpu.pipeline_mode<synchronous>, transform_indices = @transform_8, window_bounds = array<i64: 32, 8>}, {pipeline_mode = #tpu.pipeline_mode<synchronous>, transform_indices = @transform_9, window_bounds = array<i64: 1, 232>}, {transform_indices = @transform_10, window_bounds = array<i64: 8, 8>}]} {
    %c0 = arith.constant 0 : index
    %c0_0 = arith.constant 0 : index
    %0 = vector.load %arg10[%c0, %c0_0] : memref<1x232xf32, #tpu.memory_space<vmem>>, vector<1x128xf32>
    %c0_1 = arith.constant 0 : index
    %c128 = arith.constant 128 : index
    %1 = vector.load %arg10[%c0_1, %c128] : memref<1x232xf32, #tpu.memory_space<vmem>>, vector<1x32xf32>
    %c0_2 = arith.constant 0 : index
    %c160 = arith.constant 160 : index
    %2 = vector.load %arg10[%c0_2, %c160] : memref<1x232xf32, #tpu.memory_space<vmem>>, vector<1x32xf32>
    %c0_3 = arith.constant 0 : index
    %c192 = arith.constant 192 : index
    %3 = vector.load %arg10[%c0_3, %c192] : memref<1x232xf32, #tpu.memory_space<vmem>>, vector<1x32xf32>
    %c0_4 = arith.constant 0 : index
    %c224 = arith.constant 224 : index
    %4 = vector.load %arg10[%c0_4, %c224] : memref<1x232xf32, #tpu.memory_space<vmem>>, vector<1x8xf32>
    %c0_5 = arith.constant 0 : index
    %c0_6 = arith.constant 0 : index
    %c0_7 = arith.constant 0 : index
    %5 = vector.load %arg1[%c0_5, %c0_6, %c0_7] : memref<8x8x12xf32, #tpu.memory_space<vmem>>, vector<8x8x12xf32>
    %6 = vector.shape_cast %5 : vector<8x8x12xf32> to vector<64x12xf32>
    %c0_8 = arith.constant 0 : index
    %c0_9 = arith.constant 0 : index
    %c0_10 = arith.constant 0 : index
    %7 = vector.load %arg2[%c0_8, %c0_9, %c0_10] : memref<8x8x4xf32, #tpu.memory_space<vmem>>, vector<8x8x4xf32>
    %8 = vector.shape_cast %7 : vector<8x8x4xf32> to vector<64x4xf32>
    %c0_11 = arith.constant 0 : index
    %c0_12 = arith.constant 0 : index
    %9 = vector.load %arg3[%c0_11, %c0_12] : memref<12x32xf32, #tpu.memory_space<vmem>>, vector<12x32xf32>
    %cst = arith.constant dense<0.000000e+00> : vector<64x32xf32>
    %10 = tpu.matmul %6, %9, %cst {dimension_numbers = #tpu.dot_dimension_numbers<[1], [0], [0], [1], [0, 0, 1, 1], [], []>} : vector<64x12xf32>, vector<12x32xf32>, vector<64x32xf32> -> vector<64x32xf32>
    %c0_13 = arith.constant 0 : index
    %c0_14 = arith.constant 0 : index
    %11 = vector.load %arg4[%c0_13, %c0_14] : memref<4x32xf32, #tpu.memory_space<vmem>>, vector<4x32xf32>
    %cst_15 = arith.constant dense<0.000000e+00> : vector<64x32xf32>
    %12 = tpu.matmul %8, %11, %cst_15 {dimension_numbers = #tpu.dot_dimension_numbers<[1], [0], [0], [1], [0, 0, 1, 1], [], []>} : vector<64x4xf32>, vector<4x32xf32>, vector<64x32xf32> -> vector<64x32xf32>
    %13 = arith.addf %10, %12 : vector<64x32xf32>
    %14 = vector.broadcast %1 : vector<1x32xf32> to vector<64x32xf32>
    %15 = arith.addf %13, %14 : vector<64x32xf32>
    %cst_16 = arith.constant 0.000000e+00 : f32
    %16 = vector.broadcast %cst_16 : f32 to vector<64x32xf32>
    %17 = arith.maximumf %15, %16 : vector<64x32xf32>
    %c0_17 = arith.constant 0 : index
    %c0_18 = arith.constant 0 : index
    %18 = vector.load %arg5[%c0_17, %c0_18] : memref<32x32xf32, #tpu.memory_space<vmem>>, vector<32x32xf32>
    %cst_19 = arith.constant dense<0.000000e+00> : vector<64x32xf32>
    %19 = tpu.matmul %17, %18, %cst_19 {dimension_numbers = #tpu.dot_dimension_numbers<[1], [0], [0], [1], [0, 0, 1, 1], [], []>} : vector<64x32xf32>, vector<32x32xf32>, vector<64x32xf32> -> vector<64x32xf32>
    %20 = vector.broadcast %2 : vector<1x32xf32> to vector<64x32xf32>
    %21 = arith.addf %19, %20 : vector<64x32xf32>
    %cst_20 = arith.constant 0.000000e+00 : f32
    %22 = vector.broadcast %cst_20 : f32 to vector<64x32xf32>
    %23 = arith.maximumf %21, %22 : vector<64x32xf32>
    %c0_21 = arith.constant 0 : index
    %c0_22 = arith.constant 0 : index
    %24 = vector.load %arg6[%c0_21, %c0_22] : memref<32x128xf32, #tpu.memory_space<vmem>>, vector<32x128xf32>
    %cst_23 = arith.constant dense<0.000000e+00> : vector<64x128xf32>
    %25 = tpu.matmul %23, %24, %cst_23 {dimension_numbers = #tpu.dot_dimension_numbers<[1], [0], [0], [1], [0, 0, 1, 1], [], []>} : vector<64x32xf32>, vector<32x128xf32>, vector<64x128xf32> -> vector<64x128xf32>
    %26 = vector.broadcast %0 : vector<1x128xf32> to vector<64x128xf32>
    %27 = arith.addf %25, %26 : vector<64x128xf32>
    %28 = vector.shape_cast %27 : vector<64x128xf32> to vector<8x8x128xf32>
    %c0_24 = arith.constant 0 : index
    %c0_25 = arith.constant 0 : index
    %c0_26 = arith.constant 0 : index
    %29 = vector.load %arg12[%c0_24, %c0_25, %c0_26] : memref<8x8x128xf32, #tpu.memory_space<vmem>>, vector<8x8x128xf32>
    tpu.vector_store %arg12[%c0_24, %c0_25, %c0_26], %28 {strides = array<i32>} : memref<8x8x128xf32, #tpu.memory_space<vmem>>, vector<8x8x128xf32>,
    %c0_27 = arith.constant 0 : index
    %c0_28 = arith.constant 0 : index
    %30 = vector.load %arg7[%c0_27, %c0_28] : memref<32x128xf32, #tpu.memory_space<vmem>>, vector<32x128xf32>
    %c0_29 = arith.constant 0 : index
    %c0_30 = arith.constant 0 : index
    %c0_31 = arith.constant 0 : index
    %31 = vector.load %arg12[%c0_29, %c0_30, %c0_31] : memref<8x8x128xf32, #tpu.memory_space<vmem>>, vector<1x8x128xf32>
    %32 = vector.shape_cast %31 : vector<1x8x128xf32> to vector<8x128xf32>
    %33 = arith.negf %32 : vector<8x128xf32>
    %34 = math.exp %33 : vector<8x128xf32>
    %cst_32 = arith.constant 1.000000e+00 : f32
    %35 = vector.broadcast %cst_32 : f32 to vector<8x128xf32>
    %36 = arith.addf %35, %34 : vector<8x128xf32>
    %37 = arith.divf %35, %36 : vector<8x128xf32>
    %38 = vector.extract_strided_slice %37 {offsets = [0, 0], sizes = [8, 32], strides = [1, 1]} : vector<8x128xf32> to vector<8x32xf32>
    %39 = vector.extract_strided_slice %32 {offsets = [0, 64], sizes = [8, 32], strides = [1, 1]} : vector<8x128xf32> to vector<8x32xf32>
    %40 = math.tanh %39 : vector<8x32xf32>
    %41 = arith.mulf %38, %40 : vector<8x32xf32>
    %42 = vector.extract_strided_slice %37 {offsets = [0, 96], sizes = [8, 32], strides = [1, 1]} : vector<8x128xf32> to vector<8x32xf32>
    %43 = math.tanh %41 : vector<8x32xf32>
    %44 = arith.mulf %42, %43 : vector<8x32xf32>
    %c1_i32 = arith.constant 1 : i32
    %45 = arith.index_cast %c1_i32 : i32 to index
    %c0_33 = arith.constant 0 : index
    %c0_34 = arith.constant 0 : index
    %46 = vector.load %arg12[%45, %c0_33, %c0_34] : memref<8x8x128xf32, #tpu.memory_space<vmem>>, vector<1x8x128xf32>
    %47 = vector.shape_cast %46 : vector<1x8x128xf32> to vector<8x128xf32>
    %cst_35 = arith.constant dense<0.000000e+00> : vector<8x128xf32>
    %48 = tpu.matmul %44, %30, %cst_35 {dimension_numbers = #tpu.dot_dimension_numbers<[1], [0], [0], [1], [0, 0, 1, 1], [], []>} : vector<8x32xf32>, vector<32x128xf32>, vector<8x128xf32> -> vector<8x128xf32>
    %49 = arith.addf %47, %48 : vector<8x128xf32>
    %50 = arith.negf %49 : vector<8x128xf32>
    %51 = math.exp %50 : vector<8x128xf32>
    %cst_36 = arith.constant 1.000000e+00 : f32
    %52 = vector.broadcast %cst_36 : f32 to vector<8x128xf32>
    %53 = arith.addf %52, %51 : vector<8x128xf32>
    %54 = arith.divf %52, %53 : vector<8x128xf32>
    %55 = vector.extract_strided_slice %54 {offsets = [0, 0], sizes = [8, 32], strides = [1, 1]} : vector<8x128xf32> to vector<8x32xf32>
    %56 = vector.extract_strided_slice %54 {offsets = [0, 32], sizes = [8, 32], strides = [1, 1]} : vector<8x128xf32> to vector<8x32xf32>
    %57 = vector.extract_strided_slice %54 {offsets = [0, 96], sizes = [8, 32], strides = [1, 1]} : vector<8x128xf32> to vector<8x32xf32>
    %58 = vector.extract_strided_slice %49 {offsets = [0, 64], sizes = [8, 32], strides = [1, 1]} : vector<8x128xf32> to vector<8x32xf32>
    %59 = math.tanh %58 : vector<8x32xf32>
    %60 = arith.mulf %56, %41 : vector<8x32xf32>
    %61 = arith.mulf %55, %59 : vector<8x32xf32>
    %62 = arith.addf %60, %61 : vector<8x32xf32>
    %63 = math.tanh %62 : vector<8x32xf32>
    %64 = arith.mulf %57, %63 : vector<8x32xf32>
    %c2_i32 = arith.constant 2 : i32
    %65 = arith.index_cast %c2_i32 : i32 to index
    %c0_37 = arith.constant 0 : index
    %c0_38 = arith.constant 0 : index
    %66 = vector.load %arg12[%65, %c0_37, %c0_38] : memref<8x8x128xf32, #tpu.memory_space<vmem>>, vector<1x8x128xf32>
    %67 = vector.shape_cast %66 : vector<1x8x128xf32> to vector<8x128xf32>
    %cst_39 = arith.constant dense<0.000000e+00> : vector<8x128xf32>
    %68 = tpu.matmul %64, %30, %cst_39 {dimension_numbers = #tpu.dot_dimension_numbers<[1], [0], [0], [1], [0, 0, 1, 1], [], []>} : vector<8x32xf32>, vector<32x128xf32>, vector<8x128xf32> -> vector<8x128xf32>
    %69 = arith.addf %67, %68 : vector<8x128xf32>
    %70 = arith.negf %69 : vector<8x128xf32>
    %71 = math.exp %70 : vector<8x128xf32>
    %cst_40 = arith.constant 1.000000e+00 : f32
    %72 = vector.broadcast %cst_40 : f32 to vector<8x128xf32>
    %73 = arith.addf %72, %71 : vector<8x128xf32>
    %74 = arith.divf %72, %73 : vector<8x128xf32>
    %75 = vector.extract_strided_slice %74 {offsets = [0, 0], sizes = [8, 32], strides = [1, 1]} : vector<8x128xf32> to vector<8x32xf32>
    %76 = vector.extract_strided_slice %74 {offsets = [0, 32], sizes = [8, 32], strides = [1, 1]} : vector<8x128xf32> to vector<8x32xf32>
    %77 = vector.extract_strided_slice %74 {offsets = [0, 96], sizes = [8, 32], strides = [1, 1]} : vector<8x128xf32> to vector<8x32xf32>
    %78 = vector.extract_strided_slice %69 {offsets = [0, 64], sizes = [8, 32], strides = [1, 1]} : vector<8x128xf32> to vector<8x32xf32>
    %79 = math.tanh %78 : vector<8x32xf32>
    %80 = arith.mulf %76, %62 : vector<8x32xf32>
    %81 = arith.mulf %75, %79 : vector<8x32xf32>
    %82 = arith.addf %80, %81 : vector<8x32xf32>
    %83 = math.tanh %82 : vector<8x32xf32>
    %84 = arith.mulf %77, %83 : vector<8x32xf32>
    %c3_i32 = arith.constant 3 : i32
    %85 = arith.index_cast %c3_i32 : i32 to index
    %c0_41 = arith.constant 0 : index
    %c0_42 = arith.constant 0 : index
    %86 = vector.load %arg12[%85, %c0_41, %c0_42] : memref<8x8x128xf32, #tpu.memory_space<vmem>>, vector<1x8x128xf32>
    %87 = vector.shape_cast %86 : vector<1x8x128xf32> to vector<8x128xf32>
    %cst_43 = arith.constant dense<0.000000e+00> : vector<8x128xf32>
    %88 = tpu.matmul %84, %30, %cst_43 {dimension_numbers = #tpu.dot_dimension_numbers<[1], [0], [0], [1], [0, 0, 1, 1], [], []>} : vector<8x32xf32>, vector<32x128xf32>, vector<8x128xf32> -> vector<8x128xf32>
    %89 = arith.addf %87, %88 : vector<8x128xf32>
    %90 = arith.negf %89 : vector<8x128xf32>
    %91 = math.exp %90 : vector<8x128xf32>
    %cst_44 = arith.constant 1.000000e+00 : f32
    %92 = vector.broadcast %cst_44 : f32 to vector<8x128xf32>
    %93 = arith.addf %92, %91 : vector<8x128xf32>
    %94 = arith.divf %92, %93 : vector<8x128xf32>
    %95 = vector.extract_strided_slice %94 {offsets = [0, 0], sizes = [8, 32], strides = [1, 1]} : vector<8x128xf32> to vector<8x32xf32>
    %96 = vector.extract_strided_slice %94 {offsets = [0, 32], sizes = [8, 32], strides = [1, 1]} : vector<8x128xf32> to vector<8x32xf32>
    %97 = vector.extract_strided_slice %94 {offsets = [0, 96], sizes = [8, 32], strides = [1, 1]} : vector<8x128xf32> to vector<8x32xf32>
    %98 = vector.extract_strided_slice %89 {offsets = [0, 64], sizes = [8, 32], strides = [1, 1]} : vector<8x128xf32> to vector<8x32xf32>
    %99 = math.tanh %98 : vector<8x32xf32>
    %100 = arith.mulf %96, %82 : vector<8x32xf32>
    %101 = arith.mulf %95, %99 : vector<8x32xf32>
    %102 = arith.addf %100, %101 : vector<8x32xf32>
    %103 = math.tanh %102 : vector<8x32xf32>
    %104 = arith.mulf %97, %103 : vector<8x32xf32>
    %c4_i32 = arith.constant 4 : i32
    %105 = arith.index_cast %c4_i32 : i32 to index
    %c0_45 = arith.constant 0 : index
    %c0_46 = arith.constant 0 : index
    %106 = vector.load %arg12[%105, %c0_45, %c0_46] : memref<8x8x128xf32, #tpu.memory_space<vmem>>, vector<1x8x128xf32>
    %107 = vector.shape_cast %106 : vector<1x8x128xf32> to vector<8x128xf32>
    %cst_47 = arith.constant dense<0.000000e+00> : vector<8x128xf32>
    %108 = tpu.matmul %104, %30, %cst_47 {dimension_numbers = #tpu.dot_dimension_numbers<[1], [0], [0], [1], [0, 0, 1, 1], [], []>} : vector<8x32xf32>, vector<32x128xf32>, vector<8x128xf32> -> vector<8x128xf32>
    %109 = arith.addf %107, %108 : vector<8x128xf32>
    %110 = arith.negf %109 : vector<8x128xf32>
    %111 = math.exp %110 : vector<8x128xf32>
    %cst_48 = arith.constant 1.000000e+00 : f32
    %112 = vector.broadcast %cst_48 : f32 to vector<8x128xf32>
    %113 = arith.addf %112, %111 : vector<8x128xf32>
    %114 = arith.divf %112, %113 : vector<8x128xf32>
    %115 = vector.extract_strided_slice %114 {offsets = [0, 0], sizes = [8, 32], strides = [1, 1]} : vector<8x128xf32> to vector<8x32xf32>
    %116 = vector.extract_strided_slice %114 {offsets = [0, 32], sizes = [8, 32], strides = [1, 1]} : vector<8x128xf32> to vector<8x32xf32>
    %117 = vector.extract_strided_slice %114 {offsets = [0, 96], sizes = [8, 32], strides = [1, 1]} : vector<8x128xf32> to vector<8x32xf32>
    %118 = vector.extract_strided_slice %109 {offsets = [0, 64], sizes = [8, 32], strides = [1, 1]} : vector<8x128xf32> to vector<8x32xf32>
    %119 = math.tanh %118 : vector<8x32xf32>
    %120 = arith.mulf %116, %102 : vector<8x32xf32>
    %121 = arith.mulf %115, %119 : vector<8x32xf32>
    %122 = arith.addf %120, %121 : vector<8x32xf32>
    %123 = math.tanh %122 : vector<8x32xf32>
    %124 = arith.mulf %117, %123 : vector<8x32xf32>
    %c5_i32 = arith.constant 5 : i32
    %125 = arith.index_cast %c5_i32 : i32 to index
    %c0_49 = arith.constant 0 : index
    %c0_50 = arith.constant 0 : index
    %126 = vector.load %arg12[%125, %c0_49, %c0_50] : memref<8x8x128xf32, #tpu.memory_space<vmem>>, vector<1x8x128xf32>
    %127 = vector.shape_cast %126 : vector<1x8x128xf32> to vector<8x128xf32>
    %cst_51 = arith.constant dense<0.000000e+00> : vector<8x128xf32>
    %128 = tpu.matmul %124, %30, %cst_51 {dimension_numbers = #tpu.dot_dimension_numbers<[1], [0], [0], [1], [0, 0, 1, 1], [], []>} : vector<8x32xf32>, vector<32x128xf32>, vector<8x128xf32> -> vector<8x128xf32>
    %129 = arith.addf %127, %128 : vector<8x128xf32>
    %130 = arith.negf %129 : vector<8x128xf32>
    %131 = math.exp %130 : vector<8x128xf32>
    %cst_52 = arith.constant 1.000000e+00 : f32
    %132 = vector.broadcast %cst_52 : f32 to vector<8x128xf32>
    %133 = arith.addf %132, %131 : vector<8x128xf32>
    %134 = arith.divf %132, %133 : vector<8x128xf32>
    %135 = vector.extract_strided_slice %134 {offsets = [0, 0], sizes = [8, 32], strides = [1, 1]} : vector<8x128xf32> to vector<8x32xf32>
    %136 = vector.extract_strided_slice %134 {offsets = [0, 32], sizes = [8, 32], strides = [1, 1]} : vector<8x128xf32> to vector<8x32xf32>
    %137 = vector.extract_strided_slice %134 {offsets = [0, 96], sizes = [8, 32], strides = [1, 1]} : vector<8x128xf32> to vector<8x32xf32>
    %138 = vector.extract_strided_slice %129 {offsets = [0, 64], sizes = [8, 32], strides = [1, 1]} : vector<8x128xf32> to vector<8x32xf32>
    %139 = math.tanh %138 : vector<8x32xf32>
    %140 = arith.mulf %136, %122 : vector<8x32xf32>
    %141 = arith.mulf %135, %139 : vector<8x32xf32>
    %142 = arith.addf %140, %141 : vector<8x32xf32>
    %143 = math.tanh %142 : vector<8x32xf32>
    %144 = arith.mulf %137, %143 : vector<8x32xf32>
    %c6_i32 = arith.constant 6 : i32
    %145 = arith.index_cast %c6_i32 : i32 to index
    %c0_53 = arith.constant 0 : index
    %c0_54 = arith.constant 0 : index
    %146 = vector.load %arg12[%145, %c0_53, %c0_54] : memref<8x8x128xf32, #tpu.memory_space<vmem>>, vector<1x8x128xf32>
    %147 = vector.shape_cast %146 : vector<1x8x128xf32> to vector<8x128xf32>
    %cst_55 = arith.constant dense<0.000000e+00> : vector<8x128xf32>
    %148 = tpu.matmul %144, %30, %cst_55 {dimension_numbers = #tpu.dot_dimension_numbers<[1], [0], [0], [1], [0, 0, 1, 1], [], []>} : vector<8x32xf32>, vector<32x128xf32>, vector<8x128xf32> -> vector<8x128xf32>
    %149 = arith.addf %147, %148 : vector<8x128xf32>
    %150 = arith.negf %149 : vector<8x128xf32>
    %151 = math.exp %150 : vector<8x128xf32>
    %cst_56 = arith.constant 1.000000e+00 : f32
    %152 = vector.broadcast %cst_56 : f32 to vector<8x128xf32>
    %153 = arith.addf %152, %151 : vector<8x128xf32>
    %154 = arith.divf %152, %153 : vector<8x128xf32>
    %155 = vector.extract_strided_slice %154 {offsets = [0, 0], sizes = [8, 32], strides = [1, 1]} : vector<8x128xf32> to vector<8x32xf32>
    %156 = vector.extract_strided_slice %154 {offsets = [0, 32], sizes = [8, 32], strides = [1, 1]} : vector<8x128xf32> to vector<8x32xf32>
    %157 = vector.extract_strided_slice %154 {offsets = [0, 96], sizes = [8, 32], strides = [1, 1]} : vector<8x128xf32> to vector<8x32xf32>
    %158 = vector.extract_strided_slice %149 {offsets = [0, 64], sizes = [8, 32], strides = [1, 1]} : vector<8x128xf32> to vector<8x32xf32>
    %159 = math.tanh %158 : vector<8x32xf32>
    %160 = arith.mulf %156, %142 : vector<8x32xf32>
    %161 = arith.mulf %155, %159 : vector<8x32xf32>
    %162 = arith.addf %160, %161 : vector<8x32xf32>
    %163 = math.tanh %162 : vector<8x32xf32>
    %164 = arith.mulf %157, %163 : vector<8x32xf32>
    %c7_i32 = arith.constant 7 : i32
    %165 = arith.index_cast %c7_i32 : i32 to index
    %c0_57 = arith.constant 0 : index
    %c0_58 = arith.constant 0 : index
    %166 = vector.load %arg12[%165, %c0_57, %c0_58] : memref<8x8x128xf32, #tpu.memory_space<vmem>>, vector<1x8x128xf32>
    %167 = vector.shape_cast %166 : vector<1x8x128xf32> to vector<8x128xf32>
    %cst_59 = arith.constant dense<0.000000e+00> : vector<8x128xf32>
    %168 = tpu.matmul %164, %30, %cst_59 {dimension_numbers = #tpu.dot_dimension_numbers<[1], [0], [0], [1], [0, 0, 1, 1], [], []>} : vector<8x32xf32>, vector<32x128xf32>, vector<8x128xf32> -> vector<8x128xf32>
    %169 = arith.addf %167, %168 : vector<8x128xf32>
    %170 = arith.negf %169 : vector<8x128xf32>
    %171 = math.exp %170 : vector<8x128xf32>
    %cst_60 = arith.constant 1.000000e+00 : f32
    %172 = vector.broadcast %cst_60 : f32 to vector<8x128xf32>
    %173 = arith.addf %172, %171 : vector<8x128xf32>
    %174 = arith.divf %172, %173 : vector<8x128xf32>
    %175 = vector.extract_strided_slice %174 {offsets = [0, 0], sizes = [8, 32], strides = [1, 1]} : vector<8x128xf32> to vector<8x32xf32>
    %176 = vector.extract_strided_slice %174 {offsets = [0, 32], sizes = [8, 32], strides = [1, 1]} : vector<8x128xf32> to vector<8x32xf32>
    %177 = vector.extract_strided_slice %174 {offsets = [0, 96], sizes = [8, 32], strides = [1, 1]} : vector<8x128xf32> to vector<8x32xf32>
    %178 = vector.extract_strided_slice %169 {offsets = [0, 64], sizes = [8, 32], strides = [1, 1]} : vector<8x128xf32> to vector<8x32xf32>
    %179 = math.tanh %178 : vector<8x32xf32>
    %180 = arith.mulf %176, %162 : vector<8x32xf32>
    %181 = arith.mulf %175, %179 : vector<8x32xf32>
    %182 = arith.addf %180, %181 : vector<8x32xf32>
    %183 = math.tanh %182 : vector<8x32xf32>
    %184 = arith.mulf %177, %183 : vector<8x32xf32>
    %c7_i32_61 = arith.constant 7 : i32
    %c0_62 = arith.constant 0 : index
    %c0_63 = arith.constant 0 : index
    %185 = vector.load %arg8[%c0_62, %c0_63] : memref<32x32xf32, #tpu.memory_space<vmem>>, vector<32x32xf32>
    %cst_64 = arith.constant dense<0.000000e+00> : vector<8x32xf32>
    %186 = tpu.matmul %184, %185, %cst_64 {dimension_numbers = #tpu.dot_dimension_numbers<[1], [0], [0], [1], [0, 0, 1, 1], [], []>} : vector<8x32xf32>, vector<32x32xf32>, vector<8x32xf32> -> vector<8x32xf32>
    %187 = vector.broadcast %3 : vector<1x32xf32> to vector<8x32xf32>
    %188 = arith.addf %186, %187 : vector<8x32xf32>
    %cst_65 = arith.constant 0.000000e+00 : f32
    %189 = vector.broadcast %cst_65 : f32 to vector<8x32xf32>
    %190 = arith.maximumf %188, %189 : vector<8x32xf32>
    %c0_66 = arith.constant 0 : index
    %c0_67 = arith.constant 0 : index
    %191 = vector.load %arg9[%c0_66, %c0_67] : memref<32x8xf32, #tpu.memory_space<vmem>>, vector<32x8xf32>
    %cst_68 = arith.constant dense<0.000000e+00> : vector<8x8xf32>
    %192 = tpu.matmul %190, %191, %cst_68 {dimension_numbers = #tpu.dot_dimension_numbers<[1], [0], [0], [1], [0, 0, 1, 1], [], []>} : vector<8x32xf32>, vector<32x8xf32>, vector<8x8xf32> -> vector<8x8xf32>
    %193 = vector.broadcast %4 : vector<1x8xf32> to vector<8x8xf32>
    %194 = arith.addf %192, %193 : vector<8x8xf32>
    %c0_69 = arith.constant 0 : index
    %c0_70 = arith.constant 0 : index
    %195 = vector.load %arg11[%c0_69, %c0_70] : memref<8x8xf32, #tpu.memory_space<vmem>>, vector<8x8xf32>
    tpu.vector_store %arg11[%c0_69, %c0_70], %194 {strides = array<i32>} : memref<8x8xf32, #tpu.memory_space<vmem>>, vector<8x8xf32>,
    return
  }
  func.func @transform_0(%arg0: i32) -> (i32, i32, i32) {
    %c0_i32 = arith.constant 0 : i32
    %c0_i32_0 = arith.constant 0 : i32
    %c0_i32_1 = arith.constant 0 : i32
    return %c0_i32, %arg0, %c0_i32_0 : i32, i32, i32
  }
  func.func @transform_1(%arg0: i32) -> (i32, i32, i32) {
    %c0_i32 = arith.constant 0 : i32
    %c0_i32_0 = arith.constant 0 : i32
    %c0_i32_1 = arith.constant 0 : i32
    return %c0_i32, %arg0, %c0_i32_0 : i32, i32, i32
  }
  func.func @transform_2(%arg0: i32) -> (i32, i32) {
    %c0_i32 = arith.constant 0 : i32
    %c0_i32_0 = arith.constant 0 : i32
    %c0_i32_1 = arith.constant 0 : i32
    return %c0_i32, %c0_i32_0 : i32, i32
  }
  func.func @transform_3(%arg0: i32) -> (i32, i32) {
    %c0_i32 = arith.constant 0 : i32
    %c0_i32_0 = arith.constant 0 : i32
    %c0_i32_1 = arith.constant 0 : i32
    return %c0_i32, %c0_i32_0 : i32, i32
  }
  func.func @transform_4(%arg0: i32) -> (i32, i32) {
    %c0_i32 = arith.constant 0 : i32
    %c0_i32_0 = arith.constant 0 : i32
    %c0_i32_1 = arith.constant 0 : i32
    return %c0_i32, %c0_i32_0 : i32, i32
  }
  func.func @transform_5(%arg0: i32) -> (i32, i32) {
    %c0_i32 = arith.constant 0 : i32
    %c0_i32_0 = arith.constant 0 : i32
    %c0_i32_1 = arith.constant 0 : i32
    return %c0_i32, %c0_i32_0 : i32, i32
  }
  func.func @transform_6(%arg0: i32) -> (i32, i32) {
    %c0_i32 = arith.constant 0 : i32
    %c0_i32_0 = arith.constant 0 : i32
    %c0_i32_1 = arith.constant 0 : i32
    return %c0_i32, %c0_i32_0 : i32, i32
  }
  func.func @transform_7(%arg0: i32) -> (i32, i32) {
    %c0_i32 = arith.constant 0 : i32
    %c0_i32_0 = arith.constant 0 : i32
    %c0_i32_1 = arith.constant 0 : i32
    return %c0_i32, %c0_i32_0 : i32, i32
  }
  func.func @transform_8(%arg0: i32) -> (i32, i32) {
    %c0_i32 = arith.constant 0 : i32
    %c0_i32_0 = arith.constant 0 : i32
    %c0_i32_1 = arith.constant 0 : i32
    return %c0_i32, %c0_i32_0 : i32, i32
  }
  func.func @transform_9(%arg0: i32) -> (i32, i32) {
    %c0_i32 = arith.constant 0 : i32
    %c0_i32_0 = arith.constant 0 : i32
    %c0_i32_1 = arith.constant 0 : i32
    return %c0_i32, %c0_i32_0 : i32, i32
  }
  func.func @transform_10(%arg0: i32) -> (i32, i32) {
    %c0_i32 = arith.constant 0 : i32
    %c0_i32_0 = arith.constant 0 : i32
    return %arg0, %c0_i32 : i32, i32
  }
}

</mosaic_0001>

<llo_original>
// kernel: a_call__.1
$region0: #{a_call__.1}
  #allocation0 [shape = 'u32[]', space=smem, size = 0x4, offset = 0x4, fixed_abs, tag = 'smem constant byte address 0x4 - core index']
  #allocation1 [shape = 'u32[144,128]{1,0:T(1,128)}', space=vmem, size = 0x12000, scoped, tag = 'internal scratch']
  #allocation2 [shape = 'f32[8,8,128]{2,1,0:T(8,128)}', space=vmem, size = 0x8000, scoped, tag = 'scratch operand']
  %s0 = inlined_call_operand.vmem [shape: f32[8,8,12], index: 0, kind: input, shape index: {}]
  %s1 = inlined_call_operand.vmem [shape: f32[8,8,4], index: 1, kind: input, shape index: {}]
  %s2 = inlined_call_operand.vmem [shape: f32[12,32], index: 2, kind: input, shape index: {}]
  %s3 = inlined_call_operand.vmem [shape: f32[4,32], index: 3, kind: input, shape index: {}]
  %s4 = inlined_call_operand.vmem [shape: f32[32,32], index: 4, kind: input, shape index: {}]
  %s5 = inlined_call_operand.vmem [shape: f32[32,128], index: 5, kind: input, shape index: {}]
  %s6 = inlined_call_operand.vmem [shape: f32[32,128], index: 6, kind: input, shape index: {}]
  %s7 = inlined_call_operand.vmem [shape: f32[32,32], index: 7, kind: input, shape index: {}]
  %s8 = inlined_call_operand.vmem [shape: f32[32,8], index: 8, kind: input, shape index: {}]
  %s9 = inlined_call_operand.vmem [shape: f32[1,232], index: 9, kind: input, shape index: {}]
  %s10 = inlined_call_operand.vmem [shape: f32[8,8], index: 10, kind: output, shape index: {}]
  %s11 = sld [smem:[#allocation0]]
  $region50: #{a_call__.1} parent=0
    _
  %s13 = ssub.s32 1, %s11
  %s14 = scalar_select 0, %s13, %s11
  // Predicated region
  $region2: #{a_call__.1} parent=0 // pred_check
    _
  $region3: #{a_call__.1} parent=0 // pred_check_branch
    %16 = sbr.rel (0) target = $region5
  $region4: #{a_call__.1} parent=0 // pred_region
    _
  $region5: #{a_call__.1} parent=0 // pred_fallthru
    _
  // Predicated region
  $region6: #{a_call__.1} parent=0 // pred_check
    _
  $region7: #{a_call__.1} parent=0 // pred_check_branch
    %18 = sbr.rel (0) target = $region9
  $region8: #{a_call__.1} parent=0 // pred_region
    _
  $region9: #{a_call__.1} parent=0 // pred_fallthru
    _
  // Predicated region
  $region10: #{a_call__.1} parent=0 // pred_check
    _
  $region11: #{a_call__.1} parent=0 // pred_check_branch
    %20 = sbr.rel (0) target = $region13
  $region12: #{a_call__.1} parent=0 // pred_region
    _
  $region13: #{a_call__.1} parent=0 // pred_fallthru
    _
  // Predicated region
  $region14: #{a_call__.1} parent=0 // pred_check
    _
  $region15: #{a_call__.1} parent=0 // pred_check_branch
    %22 = sbr.rel (0) target = $region17
  $region16: #{a_call__.1} parent=0 // pred_region
    _
  $region17: #{a_call__.1} parent=0 // pred_fallthru
    _
  // Predicated region
  $region18: #{a_call__.1} parent=0 // pred_check
    _
  $region19: #{a_call__.1} parent=0 // pred_check_branch
    %24 = sbr.rel (0) target = $region21
  $region20: #{a_call__.1} parent=0 // pred_region
    _
  $region21: #{a_call__.1} parent=0 // pred_fallthru
    _
  // Predicated region
  $region22: #{a_call__.1} parent=0 // pred_check
    _
  $region23: #{a_call__.1} parent=0 // pred_check_branch
    %26 = sbr.rel (0) target = $region25
  $region24: #{a_call__.1} parent=0 // pred_region
    _
  $region25: #{a_call__.1} parent=0 // pred_fallthru
    _
  // Predicated region
  $region26: #{a_call__.1} parent=0 // pred_check
    _
  $region27: #{a_call__.1} parent=0 // pred_check_branch
    %28 = sbr.rel (0) target = $region29
  $region28: #{a_call__.1} parent=0 // pred_region
    _
  $region29: #{a_call__.1} parent=0 // pred_fallthru
    _
  // Predicated region
  $region30: #{a_call__.1} parent=0 // pred_check
    _
  $region31: #{a_call__.1} parent=0 // pred_check_branch
    %30 = sbr.rel (0) target = $region33
  $region32: #{a_call__.1} parent=0 // pred_region
    _
  $region33: #{a_call__.1} parent=0 // pred_fallthru
    _
  // Predicated region
  $region34: #{a_call__.1} parent=0 // pred_check
    _
  $region35: #{a_call__.1} parent=0 // pred_check_branch
    %32 = sbr.rel (0) target = $region37
  $region36: #{a_call__.1} parent=0 // pred_region
    _
  $region37: #{a_call__.1} parent=0 // pred_fallthru
    _
  // Predicated region
  $region38: #{a_call__.1} parent=0 // pred_check
    _
  $region39: #{a_call__.1} parent=0 // pred_check_branch
    %34 = sbr.rel (0) target = $region41
  $region40: #{a_call__.1} parent=0 // pred_region
    _
  $region41: #{a_call__.1} parent=0 // pred_fallthru
    _
  %v35 = vld [vmem:[%s9] sm:$0x1]
  %v36 = vld [vmem:[%s9 + $0x1] sm:$0x1]
  %v37 = vld [vmem:[%s0] sm:$0xff]
  %v38 = vld [vmem:[%s0 + $0x8] sm:$0xff]
  %v39 = vld [vmem:[%s0 + $0x10] sm:$0xff]
  %v40 = vld [vmem:[%s0 + $0x18] sm:$0xff]
  %v41 = vld [vmem:[%s0 + $0x20] sm:$0xff]
  %v42 = vld [vmem:[%s0 + $0x28] sm:$0xff]
  %v43 = vld [vmem:[%s0 + $0x30] sm:$0xff]
  %v44 = vld [vmem:[%s0 + $0x38] sm:$0xff]
  %v45 = vld [vmem:[%s1] sm:$0xff]
  %v46 = vld [vmem:[%s1 + $0x8] sm:$0xff]
  %v47 = vld [vmem:[%s1 + $0x10] sm:$0xff]
  %v48 = vld [vmem:[%s1 + $0x18] sm:$0xff]
  %v49 = vld [vmem:[%s1 + $0x20] sm:$0xff]
  %v50 = vld [vmem:[%s1 + $0x28] sm:$0xff]
  %v51 = vld [vmem:[%s1 + $0x30] sm:$0xff]
  %v52 = vld [vmem:[%s1 + $0x38] sm:$0xff]
  %v53 = vld [vmem:[%s2] sm:$0xff]
  %v54 = vld [vmem:[%s2 + $0x8] sm:$0xf]
  %v55 = vld [vmem:[%s3] sm:$0xf]
  %vm56 = vcmask 31744
  %v58 = vsel %vm56, %v45, 0
  %v61 = vsel %vm56, %v46, 0
  %v64 = vsel %vm56, %v47, 0
  %v67 = vsel %vm56, %v48, 0
  %v70 = vsel %vm56, %v49, 0
  %v73 = vsel %vm56, %v50, 0
  %v76 = vsel %vm56, %v51, 0
  %v79 = vsel %vm56, %v52, 0
  %vm81 = vcmask 1043456
  %v83 = vsel %vm81, %v55, 0
  %85 = vmatprep.subr.mxu0 0.0
  %86 = vmatpush1.msra.mxu0 0.0
  %87 = vmatprep.subr.mxu0 0.0
  %88 = vmatpush1.msra.mxu0 0.0
  %89 = vmatprep.subr.mxu0 0.0
  %90 = vmatpush1.msra.mxu0 0.0
  %91 = vmatprep.subr.mxu0 0.0
  %92 = vmatpush1.msra.mxu0 0.0
  %93 = vmatprep.subr.mxu0 0.0
  %94 = vmatpush1.msra.mxu0 0.0
  %95 = vmatprep.subr.mxu0 0.0
  %96 = vmatpush1.msra.mxu0 0.0
  %97 = vmatprep.subr.mxu0 0.0
  %98 = vmatpush1.msra.mxu0 0.0
  %99 = vmatprep.subr.mxu0 0.0
  %100 = vmatpush1.msra.mxu0 0.0
  %101 = vmatprep.subr.mxu0 0.0
  %102 = vmatpush1.msra.mxu0 0.0
  %103 = vmatprep.subr.mxu0 0.0
  %104 = vmatpush1.msra.mxu0 0.0
  %105 = vmatprep.subr.mxu0 0.0
  %106 = vmatpush1.msra.mxu0 0.0
  %107 = vmatprep.subr.mxu0 0.0
  %108 = vmatpush1.msra.mxu0 0.0
  %109 = vmatprep.subr.mxu0 0.0
  %110 = vmatpush1.msra.mxu0 0.0
  %111 = vmatprep.subr.mxu0 0.0
  %112 = vmatpush1.msra.mxu0 0.0
  %113 = vmatprep.subr.mxu0 0.0
  %114 = vmatpush1.msra.mxu0 0.0
  %115 = vmatprep.subr.mxu0 0.0
  %116 = vmatpush1.msra.mxu0 %v83
  %117 = vmatprep.subr.mxu0 0.0
  %118 = vmatpush2.msra.mxu0 0.0
  %119 = vmatprep.subr.mxu0 0.0
  %120 = vmatpush2.msra.mxu0 0.0
  %121 = vmatprep.subr.mxu0 0.0
  %122 = vmatpush2.msra.mxu0 0.0
  %123 = vmatprep.subr.mxu0 0.0
  %124 = vmatpush2.msra.mxu0 0.0
  %125 = vmatprep.subr.mxu0 0.0
  %126 = vmatpush2.msra.mxu0 0.0
  %127 = vmatprep.subr.mxu0 0.0
  %128 = vmatpush2.msra.mxu0 0.0
  %129 = vmatprep.subr.mxu0 0.0
  %130 = vmatpush2.msra.mxu0 0.0
  %131 = vmatprep.subr.mxu0 0.0
  %132 = vmatpush2.msra.mxu0 0.0
  %133 = vmatprep.subr.mxu0 0.0
  %134 = vmatpush2.msra.mxu0 0.0
  %135 = vmatprep.subr.mxu0 0.0
  %136 = vmatpush2.msra.mxu0 0.0
  %137 = vmatprep.subr.mxu0 0.0
  %138 = vmatpush2.msra.mxu0 0.0
  %139 = vmatprep.subr.mxu0 0.0
  %140 = vmatpush2.msra.mxu0 0.0
  %141 = vmatprep.subr.mxu0 0.0
  %142 = vmatpush2.msra.mxu0 0.0
  %143 = vmatprep.subr.mxu0 0.0
  %144 = vmatpush2.msra.mxu0 0.0
  %145 = vmatprep.subr.mxu0 0.0
  %146 = vmatpush2.msra.mxu0 0.0
  %147 = vmatprep.subr.mxu0 0.0
  %148 = vmatpush2.msra.mxu0 0.0
  %149 = vmatprep.mubr.f32.mxu0 0.0
  %150 = vmatmul.mubr.f32.gmra.mxu0 %v58
  %v151 = vpop.f32.mrf.mxu0
  %v152 = vadd.f32 0.0, %v151
  %v153 = vpop.f32.mrf.mxu0
  %154 = vmatprep.mubr.f32.mxu0 0.0
  %155 = vmatmul.mubr.f32.gmra.mxu0 %v61
  %v156 = vpop.f32.mrf.mxu0
  %v157 = vadd.f32 0.0, %v156
  %v158 = vpop.f32.mrf.mxu0
  %159 = vmatprep.mubr.f32.mxu0 0.0
  %160 = vmatmul.mubr.f32.gmra.mxu0 %v64
  %v161 = vpop.f32.mrf.mxu0
  %v162 = vadd.f32 0.0, %v161
  %v163 = vpop.f32.mrf.mxu0
  %164 = vmatprep.mubr.f32.mxu0 0.0
  %165 = vmatmul.mubr.f32.gmra.mxu0 %v67
  %v166 = vpop.f32.mrf.mxu0
  %v167 = vadd.f32 0.0, %v166
  %v168 = vpop.f32.mrf.mxu0
  %169 = vmatprep.mubr.f32.mxu0 0.0
  %170 = vmatmul.mubr.f32.gmra.mxu0 %v70
  %v171 = vpop.f32.mrf.mxu0
  %v172 = vadd.f32 0.0, %v171
  %v173 = vpop.f32.mrf.mxu0
  %174 = vmatprep.mubr.f32.mxu0 0.0
  %175 = vmatmul.mubr.f32.gmra.mxu0 %v73
  %v176 = vpop.f32.mrf.mxu0
  %v177 = vadd.f32 0.0, %v176
  %v178 = vpop.f32.mrf.mxu0
  %179 = vmatprep.mubr.f32.mxu0 0.0
  %180 = vmatmul.mubr.f32.gmra.mxu0 %v76
  %v181 = vpop.f32.mrf.mxu0
  %v182 = vadd.f32 0.0, %v181
  %v183 = vpop.f32.mrf.mxu0
  %184 = vmatprep.mubr.f32.mxu0 0.0
  %185 = vmatmul.mubr.f32.gmra.mxu0 %v79
  %v186 = vpop.f32.mrf.mxu0
  %v187 = vadd.f32 0.0, %v186
  %v188 = vpop.f32.mrf.mxu0
  %189 = vdwg.mxu0
  %vm190 = vcmask 97280
  %v192 = vsel %vm190, %v37, 0
  %v195 = vsel %vm190, %v38, 0
  %v198 = vsel %vm190, %v39, 0
  %v201 = vsel %vm190, %v40, 0
  %v204 = vsel %vm190, %v41, 0
  %v207 = vsel %vm190, %v42, 0
  %v210 = vsel %vm190, %v43, 0
  %v213 = vsel %vm190, %v44, 0
  %v216 = vsel %vm81, %v54, 0
  %218 = vmatprep.subr.mxu0 0.0
  %219 = vmatpush1.msra.mxu0 0.0
  %220 = vmatprep.subr.mxu0 0.0
  %221 = vmatpush1.msra.mxu0 0.0
  %222 = vmatprep.subr.mxu0 0.0
  %223 = vmatpush1.msra.mxu0 0.0
  %224 = vmatprep.subr.mxu0 0.0
  %225 = vmatpush1.msra.mxu0 0.0
  %226 = vmatprep.subr.mxu0 0.0
  %227 = vmatpush1.msra.mxu0 0.0
  %228 = vmatprep.subr.mxu0 0.0
  %229 = vmatpush1.msra.mxu0 0.0
  %230 = vmatprep.subr.mxu0 0.0
  %231 = vmatpush1.msra.mxu0 0.0
  %232 = vmatprep.subr.mxu0 0.0
  %233 = vmatpush1.msra.mxu0 0.0
  %234 = vmatprep.subr.mxu0 0.0
  %235 = vmatpush1.msra.mxu0 0.0
  %236 = vmatprep.subr.mxu0 0.0
  %237 = vmatpush1.msra.mxu0 0.0
  %238 = vmatprep.subr.mxu0 0.0
  %239 = vmatpush1.msra.mxu0 0.0
  %240 = vmatprep.subr.mxu0 0.0
  %241 = vmatpush1.msra.mxu0 0.0
  %242 = vmatprep.subr.mxu0 0.0
  %243 = vmatpush1.msra.mxu0 0.0
  %244 = vmatprep.subr.mxu0 0.0
  %245 = vmatpush1.msra.mxu0 0.0
  %246 = vmatprep.subr.mxu0 0.0
  %247 = vmatpush1.msra.mxu0 %v216
  %248 = vmatprep.subr.mxu0 0.0
  %249 = vmatpush1.msra.mxu0 %v53
  %250 = vmatprep.subr.mxu0 0.0
  %251 = vmatpush2.msra.mxu0 0.0
  %252 = vmatprep.subr.mxu0 0.0
  %253 = vmatpush2.msra.mxu0 0.0
  %254 = vmatprep.subr.mxu0 0.0
  %255 = vmatpush2.msra.mxu0 0.0
  %256 = vmatprep.subr.mxu0 0.0
  %257 = vmatpush2.msra.mxu0 0.0
  %258 = vmatprep.subr.mxu0 0.0
  %259 = vmatpush2.msra.mxu0 0.0
  %260 = vmatprep.subr.mxu0 0.0
  %261 = vmatpush2.msra.mxu0 0.0
  %262 = vmatprep.subr.mxu0 0.0
  %263 = vmatpush2.msra.mxu0 0.0
  %264 = vmatprep.subr.mxu0 0.0
  %265 = vmatpush2.msra.mxu0 0.0
  %266 = vmatprep.subr.mxu0 0.0
  %267 = vmatpush2.msra.mxu0 0.0
  %268 = vmatprep.subr.mxu0 0.0
  %269 = vmatpush2.msra.mxu0 0.0
  %270 = vmatprep.subr.mxu0 0.0
  %271 = vmatpush2.msra.mxu0 0.0
  %272 = vmatprep.subr.mxu0 0.0
  %273 = vmatpush2.msra.mxu0 0.0
  %274 = vmatprep.subr.mxu0 0.0
  %275 = vmatpush2.msra.mxu0 0.0
  %276 = vmatprep.subr.mxu0 0.0
  %277 = vmatpush2.msra.mxu0 0.0
  %278 = vmatprep.subr.mxu0 0.0
  %279 = vmatpush2.msra.mxu0 0.0
  %280 = vmatprep.subr.mxu0 0.0
  %281 = vmatpush2.msra.mxu0 0.0
  %282 = vmatprep.mubr.f32.mxu0 0.0
  %283 = vmatmul.mubr.f32.gmra.mxu0 %v192
  %v284 = vpop.f32.mrf.mxu0
  %v285 = vadd.f32 %v152, %v284
  %v286 = vpop.f32.mrf.mxu0
  %287 = vmatprep.mubr.f32.mxu0 0.0
  %288 = vmatmul.mubr.f32.gmra.mxu0 %v195
  %v289 = vpop.f32.mrf.mxu0
  %v290 = vadd.f32 %v157, %v289
  %v291 = vpop.f32.mrf.mxu0
  %292 = vmatprep.mubr.f32.mxu0 0.0
  %293 = vmatmul.mubr.f32.gmra.mxu0 %v198
  %v294 = vpop.f32.mrf.mxu0
  %v295 = vadd.f32 %v162, %v294
  %v296 = vpop.f32.mrf.mxu0
  %297 = vmatprep.mubr.f32.mxu0 0.0
  %298 = vmatmul.mubr.f32.gmra.mxu0 %v201
  %v299 = vpop.f32.mrf.mxu0
  %v300 = vadd.f32 %v167, %v299
  %v301 = vpop.f32.mrf.mxu0
  %302 = vmatprep.mubr.f32.mxu0 0.0
  %303 = vmatmul.mubr.f32.gmra.mxu0 %v204
  %v304 = vpop.f32.mrf.mxu0
  %v305 = vadd.f32 %v172, %v304
  %v306 = vpop.f32.mrf.mxu0
  %307 = vmatprep.mubr.f32.mxu0 0.0
  %308 = vmatmul.mubr.f32.gmra.mxu0 %v207
  %v309 = vpop.f32.mrf.mxu0
  %v310 = vadd.f32 %v177, %v309
  %v311 = vpop.f32.mrf.mxu0
  %312 = vmatprep.mubr.f32.mxu0 0.0
  %313 = vmatmul.mubr.f32.gmra.mxu0 %v210
  %v314 = vpop.f32.mrf.mxu0
  %v315 = vadd.f32 %v182, %v314
  %v316 = vpop.f32.mrf.mxu0
  %317 = vmatprep.mubr.f32.mxu0 0.0
  %318 = vmatmul.mubr.f32.gmra.mxu0 %v213
  %v319 = vpop.f32.mrf.mxu0
  %v320 = vadd.f32 %v187, %v319
  %v321 = vpop.f32.mrf.mxu0
  %322 = vdwg.mxu0
  %v324 = vlaneseq
  %v325 = vshrl.u32 %v324, 7
  %v326 = vsub.s32 0, %v325
  %v327 = vrot.slane %v36, %v326
  %v329 = vadd.f32 %v285, %v327
  %v330 = vadd.f32 %v290, %v327
  %v331 = vadd.f32 %v295, %v327
  %v332 = vadd.f32 %v300, %v327
  %v333 = vadd.f32 %v305, %v327
  %v334 = vadd.f32 %v310, %v327
  %v335 = vadd.f32 %v315, %v327
  %v336 = vadd.f32 %v320, %v327
  %v337 = vmax.f32 %v329, 0.0
  %v338 = vmax.f32 %v330, 0.0
  %v339 = vmax.f32 %v331, 0.0
  %v340 = vmax.f32 %v332, 0.0
  %v341 = vmax.f32 %v333, 0.0
  %v342 = vmax.f32 %v334, 0.0
  %v343 = vmax.f32 %v335, 0.0
  %v344 = vmax.f32 %v336, 0.0
  %v345 = vld [vmem:[%s4] sm:$0xff]
  %v346 = vld [vmem:[%s4 + $0x8] sm:$0xff]
  %v347 = vld [vmem:[%s4 + $0x10] sm:$0xff]
  %v348 = vld [vmem:[%s4 + $0x18] sm:$0xff]
  %349 = vrot.lane.b32.xlu0 %v327, 96
  %v350 = vpop.permute.xlu0 %349
  %vm352 = vcmask 261120
  %v354 = vsel %vm352, %v337, 0
  %v357 = vsel %vm352, %v338, 0
  %v360 = vsel %vm352, %v339, 0
  %v363 = vsel %vm352, %v340, 0
  %v366 = vsel %vm352, %v341, 0
  %v369 = vsel %vm352, %v342, 0
  %v372 = vsel %vm352, %v343, 0
  %v375 = vsel %vm352, %v344, 0
  %377 = vmatprep.subr.mxu0 0.0
  %378 = vmatpush1.msra.mxu0 0.0
  %379 = vmatprep.subr.mxu0 0.0
  %380 = vmatpush1.msra.mxu0 0.0
  %381 = vmatprep.subr.mxu0 0.0
  %382 = vmatpush1.msra.mxu0 0.0
  %383 = vmatprep.subr.mxu0 0.0
  %384 = vmatpush1.msra.mxu0 0.0
  %385 = vmatprep.subr.mxu0 0.0
  %386 = vmatpush1.msra.mxu0 0.0
  %387 = vmatprep.subr.mxu0 0.0
  %388 = vmatpush1.msra.mxu0 0.0
  %389 = vmatprep.subr.mxu0 0.0
  %390 = vmatpush1.msra.mxu0 0.0
  %391 = vmatprep.subr.mxu0 0.0
  %392 = vmatpush1.msra.mxu0 0.0
  %393 = vmatprep.subr.mxu0 0.0
  %394 = vmatpush1.msra.mxu0 0.0
  %395 = vmatprep.subr.mxu0 0.0
  %396 = vmatpush1.msra.mxu0 0.0
  %397 = vmatprep.subr.mxu0 0.0
  %398 = vmatpush1.msra.mxu0 0.0
  %399 = vmatprep.subr.mxu0 0.0
  %400 = vmatpush1.msra.mxu0 0.0
  %401 = vmatprep.subr.mxu0 0.0
  %402 = vmatpush1.msra.mxu0 %v348
  %403 = vmatprep.subr.mxu0 0.0
  %404 = vmatpush1.msra.mxu0 %v347
  %405 = vmatprep.subr.mxu0 0.0
  %406 = vmatpush1.msra.mxu0 %v346
  %407 = vmatprep.subr.mxu0 0.0
  %408 = vmatpush1.msra.mxu0 %v345
  %409 = vmatprep.subr.mxu0 0.0
  %410 = vmatpush2.msra.mxu0 0.0
  %411 = vmatprep.subr.mxu0 0.0
  %412 = vmatpush2.msra.mxu0 0.0
  %413 = vmatprep.subr.mxu0 0.0
  %414 = vmatpush2.msra.mxu0 0.0
  %415 = vmatprep.subr.mxu0 0.0
  %416 = vmatpush2.msra.mxu0 0.0
  %417 = vmatprep.subr.mxu0 0.0
  %418 = vmatpush2.msra.mxu0 0.0
  %419 = vmatprep.subr.mxu0 0.0
  %420 = vmatpush2.msra.mxu0 0.0
  %421 = vmatprep.subr.mxu0 0.0
  %422 = vmatpush2.msra.mxu0 0.0
  %423 = vmatprep.subr.mxu0 0.0
  %424 = vmatpush2.msra.mxu0 0.0
  %425 = vmatprep.subr.mxu0 0.0
  %426 = vmatpush2.msra.mxu0 0.0
  %427 = vmatprep.subr.mxu0 0.0
  %428 = vmatpush2.msra.mxu0 0.0
  %429 = vmatprep.subr.mxu0 0.0
  %430 = vmatpush2.msra.mxu0 0.0
  %431 = vmatprep.subr.mxu0 0.0
  %432 = vmatpush2.msra.mxu0 0.0
  %433 = vmatprep.subr.mxu0 0.0
  %434 = vmatpush2.msra.mxu0 0.0
  %435 = vmatprep.subr.mxu0 0.0
  %436 = vmatpush2.msra.mxu0 0.0
  %437 = vmatprep.subr.mxu0 0.0
  %438 = vmatpush2.msra.mxu0 0.0
  %439 = vmatprep.subr.mxu0 0.0
  %440 = vmatpush2.msra.mxu0 0.0
  %441 = vmatprep.mubr.f32.mxu0 0.0
  %442 = vmatmul.mubr.f32.gmra.mxu0 %v354
  %v443 = vpop.f32.mrf.mxu0
  %v444 = vadd.f32 %v350, %v443
  %v445 = vpop.f32.mrf.mxu0
  %446 = vmatprep.mubr.f32.mxu0 0.0
  %447 = vmatmul.mubr.f32.gmra.mxu0 %v357
  %v448 = vpop.f32.mrf.mxu0
  %v449 = vadd.f32 %v350, %v448
  %v450 = vpop.f32.mrf.mxu0
  %451 = vmatprep.mubr.f32.mxu0 0.0
  %452 = vmatmul.mubr.f32.gmra.mxu0 %v360
  %v453 = vpop.f32.mrf.mxu0
  %v454 = vadd.f32 %v350, %v453
  %v455 = vpop.f32.mrf.mxu0
  %456 = vmatprep.mubr.f32.mxu0 0.0
  %457 = vmatmul.mubr.f32.gmra.mxu0 %v363
  %v458 = vpop.f32.mrf.mxu0
  %v459 = vadd.f32 %v350, %v458
  %v460 = vpop.f32.mrf.mxu0
  %461 = vmatprep.mubr.f32.mxu0 0.0
  %462 = vmatmul.mubr.f32.gmra.mxu0 %v366
  %v463 = vpop.f32.mrf.mxu0
  %v464 = vadd.f32 %v350, %v463
  %v465 = vpop.f32.mrf.mxu0
  %466 = vmatprep.mubr.f32.mxu0 0.0
  %467 = vmatmul.mubr.f32.gmra.mxu0 %v369
  %v468 = vpop.f32.mrf.mxu0
  %v469 = vadd.f32 %v350, %v468
  %v470 = vpop.f32.mrf.mxu0
  %471 = vmatprep.mubr.f32.mxu0 0.0
  %472 = vmatmul.mubr.f32.gmra.mxu0 %v372
  %v473 = vpop.f32.mrf.mxu0
  %v474 = vadd.f32 %v350, %v473
  %v475 = vpop.f32.mrf.mxu0
  %476 = vmatprep.mubr.f32.mxu0 0.0
  %477 = vmatmul.mubr.f32.gmra.mxu0 %v375
  %v478 = vpop.f32.mrf.mxu0
  %v479 = vadd.f32 %v350, %v478
  %v480 = vpop.f32.mrf.mxu0
  %481 = vdwg.mxu0
  %v482 = vmax.f32 %v444, 0.0
  %v483 = vmax.f32 %v449, 0.0
  %v484 = vmax.f32 %v454, 0.0
  %v485 = vmax.f32 %v459, 0.0
  %v486 = vmax.f32 %v464, 0.0
  %v487 = vmax.f32 %v469, 0.0
  %v488 = vmax.f32 %v474, 0.0
  %v489 = vmax.f32 %v479, 0.0
  %v490 = vld [vmem:[%s5] sm:$0xff]
  %v491 = vld [vmem:[%s5 + $0x8] sm:$0xff]
  %v492 = vld [vmem:[%s5 + $0x10] sm:$0xff]
  %v493 = vld [vmem:[%s5 + $0x18] sm:$0xff]
  %v495 = vlaneseq
  %v496 = vshrl.u32 %v495, 7
  %v497 = vsub.s32 0, %v496
  %v498 = vrot.slane %v35, %v497
  %v501 = vsel %vm352, %v482, 0
  %v504 = vsel %vm352, %v483, 0
  %v507 = vsel %vm352, %v484, 0
  %v510 = vsel %vm352, %v485, 0
  %v513 = vsel %vm352, %v486, 0
  %v516 = vsel %vm352, %v487, 0
  %v519 = vsel %vm352, %v488, 0
  %v522 = vsel %vm352, %v489, 0
  %524 = vmatprep.subr.mxu0 0.0
  %525 = vmatpush1.msra.mxu0 0.0
  %526 = vmatprep.subr.mxu0 0.0
  %527 = vmatpush1.msra.mxu0 0.0
  %528 = vmatprep.subr.mxu0 0.0
  %529 = vmatpush1.msra.mxu0 0.0
  %530 = vmatprep.subr.mxu0 0.0
  %531 = vmatpush1.msra.mxu0 0.0
  %532 = vmatprep.subr.mxu0 0.0
  %533 = vmatpush1.msra.mxu0 0.0
  %534 = vmatprep.subr.mxu0 0.0
  %535 = vmatpush1.msra.mxu0 0.0
  %536 = vmatprep.subr.mxu0 0.0
  %537 = vmatpush1.msra.mxu0 0.0
  %538 = vmatprep.subr.mxu0 0.0
  %539 = vmatpush1.msra.mxu0 0.0
  %540 = vmatprep.subr.mxu0 0.0
  %541 = vmatpush1.msra.mxu0 0.0
  %542 = vmatprep.subr.mxu0 0.0
  %543 = vmatpush1.msra.mxu0 0.0
  %544 = vmatprep.subr.mxu0 0.0
  %545 = vmatpush1.msra.mxu0 0.0
  %546 = vmatprep.subr.mxu0 0.0
  %547 = vmatpush1.msra.mxu0 0.0
  %548 = vmatprep.subr.mxu0 0.0
  %549 = vmatpush1.msra.mxu0 %v493
  %550 = vmatprep.subr.mxu0 0.0
  %551 = vmatpush1.msra.mxu0 %v492
  %552 = vmatprep.subr.mxu0 0.0
  %553 = vmatpush1.msra.mxu0 %v491
  %554 = vmatprep.subr.mxu0 0.0
  %555 = vmatpush1.msra.mxu0 %v490
  %556 = vmatprep.subr.mxu0 0.0
  %557 = vmatpush2.msra.mxu0 0.0
  %558 = vmatprep.subr.mxu0 0.0
  %559 = vmatpush2.msra.mxu0 0.0
  %560 = vmatprep.subr.mxu0 0.0
  %561 = vmatpush2.msra.mxu0 0.0
  %562 = vmatprep.subr.mxu0 0.0
  %563 = vmatpush2.msra.mxu0 0.0
  %564 = vmatprep.subr.mxu0 0.0
  %565 = vmatpush2.msra.mxu0 0.0
  %566 = vmatprep.subr.mxu0 0.0
  %567 = vmatpush2.msra.mxu0 0.0
  %568 = vmatprep.subr.mxu0 0.0
  %569 = vmatpush2.msra.mxu0 0.0
  %570 = vmatprep.subr.mxu0 0.0
  %571 = vmatpush2.msra.mxu0 0.0
  %572 = vmatprep.subr.mxu0 0.0
  %573 = vmatpush2.msra.mxu0 0.0
  %574 = vmatprep.subr.mxu0 0.0
  %575 = vmatpush2.msra.mxu0 0.0
  %576 = vmatprep.subr.mxu0 0.0
  %577 = vmatpush2.msra.mxu0 0.0
  %578 = vmatprep.subr.mxu0 0.0
  %579 = vmatpush2.msra.mxu0 0.0
  %580 = vmatprep.subr.mxu0 0.0
  %581 = vmatpush2.msra.mxu0 0.0
  %582 = vmatprep.subr.mxu0 0.0
  %583 = vmatpush2.msra.mxu0 0.0
  %584 = vmatprep.subr.mxu0 0.0
  %585 = vmatpush2.msra.mxu0 0.0
  %586 = vmatprep.subr.mxu0 0.0
  %587 = vmatpush2.msra.mxu0 0.0
  %588 = vmatprep.mubr.f32.mxu0 0.0
  %589 = vmatmul.mubr.f32.gmra.mxu0 %v501
  %v590 = vpop.f32.mrf.mxu0
  %v591 = vadd.f32 %v498, %v590
  %v592 = vpop.f32.mrf.mxu0
  %593 = vmatprep.mubr.f32.mxu0 0.0
  %594 = vmatmul.mubr.f32.gmra.mxu0 %v504
  %v595 = vpop.f32.mrf.mxu0
  %v596 = vadd.f32 %v498, %v595
  %v597 = vpop.f32.mrf.mxu0
  %598 = vmatprep.mubr.f32.mxu0 0.0
  %599 = vmatmul.mubr.f32.gmra.mxu0 %v507
  %v600 = vpop.f32.mrf.mxu0
  %v601 = vadd.f32 %v498, %v600
  %v602 = vpop.f32.mrf.mxu0
  %603 = vmatprep.mubr.f32.mxu0 0.0
  %604 = vmatmul.mubr.f32.gmra.mxu0 %v510
  %v605 = vpop.f32.mrf.mxu0
  %v606 = vadd.f32 %v498, %v605
  %v607 = vpop.f32.mrf.mxu0
  %608 = vmatprep.mubr.f32.mxu0 0.0
  %609 = vmatmul.mubr.f32.gmra.mxu0 %v513
  %v610 = vpop.f32.mrf.mxu0
  %v611 = vadd.f32 %v498, %v610
  %v612 = vpop.f32.mrf.mxu0
  %613 = vmatprep.mubr.f32.mxu0 0.0
  %614 = vmatmul.mubr.f32.gmra.mxu0 %v516
  %v615 = vpop.f32.mrf.mxu0
  %v616 = vadd.f32 %v498, %v615
  %v617 = vpop.f32.mrf.mxu0
  %618 = vmatprep.mubr.f32.mxu0 0.0
  %619 = vmatmul.mubr.f32.gmra.mxu0 %v519
  %v620 = vpop.f32.mrf.mxu0
  %v621 = vadd.f32 %v498, %v620
  %v622 = vpop.f32.mrf.mxu0
  %623 = vmatprep.mubr.f32.mxu0 0.0
  %624 = vmatmul.mubr.f32.gmra.mxu0 %v522
  %v625 = vpop.f32.mrf.mxu0
  %v626 = vadd.f32 %v498, %v625
  %v627 = vpop.f32.mrf.mxu0
  %628 = vdwg.mxu0
  %629 = vst [vmem:[#allocation2] sm:$0xff] %v591
  %630 = vst [vmem:[#allocation2 + $0x8] sm:$0xff] %v596
  %631 = vst [vmem:[#allocation2 + $0x10] sm:$0xff] %v601
  %632 = vst [vmem:[#allocation2 + $0x18] sm:$0xff] %v606
  %633 = vst [vmem:[#allocation2 + $0x20] sm:$0xff] %v611
  %634 = vst [vmem:[#allocation2 + $0x28] sm:$0xff] %v616
  %635 = vst [vmem:[#allocation2 + $0x30] sm:$0xff] %v621
  %636 = vst [vmem:[#allocation2 + $0x38] sm:$0xff] %v626
  %v637 = vld [vmem:[%s6] sm:$0xff]
  %v638 = vld [vmem:[%s6 + $0x8] sm:$0xff]
  %v639 = vld [vmem:[%s6 + $0x10] sm:$0xff]
  %v640 = vld [vmem:[%s6 + $0x18] sm:$0xff]
  %v641 = vld [vmem:[#allocation2] sm:$0xff]
  %v642 = vxor.u32 %v641, 2147483648
  %v643 = vmul.f32 %v642, 1.442695
  %v644 = vpow.pop %v643
  %v645 = vadd.f32 %v644, 1.0
  %v646 = vrcp.pop %v645
  %v647 = vmul.f32 1.0, %v646
  %v648 = vtanh.pop %v641
  %650 = vrot.lane.b32.xlu0 %v648, 64
  %v651 = vpop.permute.xlu0 %650
  %v653 = vmul.f32 %v647, %v651
  %v654 = vtanh.pop %v653
  %656 = vrot.lane.b32.xlu0 %v654, 96
  %v657 = vpop.permute.xlu0 %656
  %v659 = vmul.f32 %v647, %v657
  %s660 = scalar_lea.vmem [#allocation2], 8
  %v661 = vld [vmem:[%s660] sm:$0xff]
  %663 = vrot.lane.b32.xlu0 %v659, 32
  %v664 = vpop.permute.xlu0 %663
  %v665 = vsel %vm352, %v664, 0
  %667 = vmatprep.subr.mxu0 0.0
  %668 = vmatpush1.msra.mxu0 0.0
  %669 = vmatprep.subr.mxu0 0.0
  %670 = vmatpush1.msra.mxu0 0.0
  %671 = vmatprep.subr.mxu0 0.0
  %672 = vmatpush1.msra.mxu0 0.0
  %673 = vmatprep.subr.mxu0 0.0
  %674 = vmatpush1.msra.mxu0 0.0
  %675 = vmatprep.subr.mxu0 0.0
  %676 = vmatpush1.msra.mxu0 0.0
  %677 = vmatprep.subr.mxu0 0.0
  %678 = vmatpush1.msra.mxu0 0.0
  %679 = vmatprep.subr.mxu0 0.0
  %680 = vmatpush1.msra.mxu0 0.0
  %681 = vmatprep.subr.mxu0 0.0
  %682 = vmatpush1.msra.mxu0 0.0
  %683 = vmatprep.subr.mxu0 0.0
  %684 = vmatpush1.msra.mxu0 0.0
  %685 = vmatprep.subr.mxu0 0.0
  %686 = vmatpush1.msra.mxu0 0.0
  %687 = vmatprep.subr.mxu0 0.0
  %688 = vmatpush1.msra.mxu0 0.0
  %689 = vmatprep.subr.mxu0 0.0
  %690 = vmatpush1.msra.mxu0 0.0
  %691 = vmatprep.subr.mxu0 0.0
  %692 = vmatpush1.msra.mxu0 %v640
  %693 = vmatprep.subr.mxu0 0.0
  %694 = vmatpush1.msra.mxu0 %v639
  %695 = vmatprep.subr.mxu0 0.0
  %696 = vmatpush1.msra.mxu0 %v638
  %697 = vmatprep.subr.mxu0 0.0
  %698 = vmatpush1.msra.mxu0 %v637
  %699 = vmatprep.subr.mxu0 0.0
  %700 = vmatpush2.msra.mxu0 0.0
  %701 = vmatprep.subr.mxu0 0.0
  %702 = vmatpush2.msra.mxu0 0.0
  %703 = vmatprep.subr.mxu0 0.0
  %704 = vmatpush2.msra.mxu0 0.0
  %705 = vmatprep.subr.mxu0 0.0
  %706 = vmatpush2.msra.mxu0 0.0
  %707 = vmatprep.subr.mxu0 0.0
  %708 = vmatpush2.msra.mxu0 0.0
  %709 = vmatprep.subr.mxu0 0.0
  %710 = vmatpush2.msra.mxu0 0.0
  %711 = vmatprep.subr.mxu0 0.0
  %712 = vmatpush2.msra.mxu0 0.0
  %713 = vmatprep.subr.mxu0 0.0
  %714 = vmatpush2.msra.mxu0 0.0
  %715 = vmatprep.subr.mxu0 0.0
  %716 = vmatpush2.msra.mxu0 0.0
  %717 = vmatprep.subr.mxu0 0.0
  %718 = vmatpush2.msra.mxu0 0.0
  %719 = vmatprep.subr.mxu0 0.0
  %720 = vmatpush2.msra.mxu0 0.0
  %721 = vmatprep.subr.mxu0 0.0
  %722 = vmatpush2.msra.mxu0 0.0
  %723 = vmatprep.subr.mxu0 0.0
  %724 = vmatpush2.msra.mxu0 0.0
  %725 = vmatprep.subr.mxu0 0.0
  %726 = vmatpush2.msra.mxu0 0.0
  %727 = vmatprep.subr.mxu0 0.0
  %728 = vmatpush2.msra.mxu0 0.0
  %729 = vmatprep.subr.mxu0 0.0
  %730 = vmatpush2.msra.mxu0 0.0
  %731 = vmatprep.mubr.f32.mxu0 0.0
  %732 = vmatmul.mubr.f32.gmra.mxu0 %v665
  %v733 = vpop.f32.mrf.mxu0
  %v734 = vadd.f32 0.0, %v733
  %v735 = vpop.f32.mrf.mxu0
  %736 = vdwg.mxu0
  %v737 = vadd.f32 %v661, %v734
  %v738 = vxor.u32 %v737, 2147483648
  %v739 = vmul.f32 %v738, 1.442695
  %v740 = vpow.pop %v739
  %v741 = vadd.f32 %v740, 1.0
  %v742 = vrcp.pop %v741
  %v743 = vmul.f32 1.0, %v742
  %v744 = vtanh.pop %v737
  %746 = vrot.lane.b32.xlu0 %v653, 32
  %v747 = vpop.permute.xlu0 %746
  %v749 = vmul.f32 %v743, %v747
  %751 = vrot.lane.b32.xlu0 %v744, 64
  %v752 = vpop.permute.xlu0 %751
  %v754 = vmul.f32 %v743, %v752
  %756 = vrot.lane.b32.xlu0 %v754, 32
  %v757 = vpop.permute.xlu0 %756
  %v759 = vadd.f32 %v749, %v757
  %v760 = vtanh.pop %v759
  %762 = vrot.lane.b32.xlu0 %v760, 64
  %v763 = vpop.permute.xlu0 %762
  %v765 = vmul.f32 %v743, %v763
  %s766 = scalar_lea.vmem [#allocation2], 16
  %v767 = vld [vmem:[%s766] sm:$0xff]
  %769 = vrot.lane.b32.xlu0 %v765, 32
  %v770 = vpop.permute.xlu0 %769
  %v771 = vsel %vm352, %v770, 0
  %773 = vmatprep.subr.mxu0 0.0
  %774 = vmatpush1.msra.mxu0 0.0
  %775 = vmatprep.subr.mxu0 0.0
  %776 = vmatpush1.msra.mxu0 0.0
  %777 = vmatprep.subr.mxu0 0.0
  %778 = vmatpush1.msra.mxu0 0.0
  %779 = vmatprep.subr.mxu0 0.0
  %780 = vmatpush1.msra.mxu0 0.0
  %781 = vmatprep.subr.mxu0 0.0
  %782 = vmatpush1.msra.mxu0 0.0
  %783 = vmatprep.subr.mxu0 0.0
  %784 = vmatpush1.msra.mxu0 0.0
  %785 = vmatprep.subr.mxu0 0.0
  %786 = vmatpush1.msra.mxu0 0.0
  %787 = vmatprep.subr.mxu0 0.0
  %788 = vmatpush1.msra.mxu0 0.0
  %789 = vmatprep.subr.mxu0 0.0
  %790 = vmatpush1.msra.mxu0 0.0
  %791 = vmatprep.subr.mxu0 0.0
  %792 = vmatpush1.msra.mxu0 0.0
  %793 = vmatprep.subr.mxu0 0.0
  %794 = vmatpush1.msra.mxu0 0.0
  %795 = vmatprep.subr.mxu0 0.0
  %796 = vmatpush1.msra.mxu0 0.0
  %797 = vmatprep.subr.mxu0 0.0
  %798 = vmatpush1.msra.mxu0 %v640
  %799 = vmatprep.subr.mxu0 0.0
  %800 = vmatpush1.msra.mxu0 %v639
  %801 = vmatprep.subr.mxu0 0.0
  %802 = vmatpush1.msra.mxu0 %v638
  %803 = vmatprep.subr.mxu0 0.0
  %804 = vmatpush1.msra.mxu0 %v637
  %805 = vmatprep.subr.mxu0 0.0
  %806 = vmatpush2.msra.mxu0 0.0
  %807 = vmatprep.subr.mxu0 0.0
  %808 = vmatpush2.msra.mxu0 0.0
  %809 = vmatprep.subr.mxu0 0.0
  %810 = vmatpush2.msra.mxu0 0.0
  %811 = vmatprep.subr.mxu0 0.0
  %812 = vmatpush2.msra.mxu0 0.0
  %813 = vmatprep.subr.mxu0 0.0
  %814 = vmatpush2.msra.mxu0 0.0
  %815 = vmatprep.subr.mxu0 0.0
  %816 = vmatpush2.msra.mxu0 0.0
  %817 = vmatprep.subr.mxu0 0.0
  %818 = vmatpush2.msra.mxu0 0.0
  %819 = vmatprep.subr.mxu0 0.0
  %820 = vmatpush2.msra.mxu0 0.0
  %821 = vmatprep.subr.mxu0 0.0
  %822 = vmatpush2.msra.mxu0 0.0
  %823 = vmatprep.subr.mxu0 0.0
  %824 = vmatpush2.msra.mxu0 0.0
  %825 = vmatprep.subr.mxu0 0.0
  %826 = vmatpush2.msra.mxu0 0.0
  %827 = vmatprep.subr.mxu0 0.0
  %828 = vmatpush2.msra.mxu0 0.0
  %829 = vmatprep.subr.mxu0 0.0
  %830 = vmatpush2.msra.mxu0 0.0
  %831 = vmatprep.subr.mxu0 0.0
  %832 = vmatpush2.msra.mxu0 0.0
  %833 = vmatprep.subr.mxu0 0.0
  %834 = vmatpush2.msra.mxu0 0.0
  %835 = vmatprep.subr.mxu0 0.0
  %836 = vmatpush2.msra.mxu0 0.0
  %837 = vmatprep.mubr.f32.mxu0 0.0
  %838 = vmatmul.mubr.f32.gmra.mxu0 %v771
  %v839 = vpop.f32.mrf.mxu0
  %v840 = vadd.f32 0.0, %v839
  %v841 = vpop.f32.mrf.mxu0
  %842 = vdwg.mxu0
  %v843 = vadd.f32 %v767, %v840
  %v844 = vxor.u32 %v843, 2147483648
  %v845 = vmul.f32 %v844, 1.442695
  %v846 = vpow.pop %v845
  %v847 = vadd.f32 %v846, 1.0
  %v848 = vrcp.pop %v847
  %v849 = vmul.f32 1.0, %v848
  %v850 = vtanh.pop %v843
  %v851 = vmul.f32 %v849, %v759
  %853 = vrot.lane.b32.xlu0 %v850, 64
  %v854 = vpop.permute.xlu0 %853
  %v856 = vmul.f32 %v849, %v854
  %858 = vrot.lane.b32.xlu0 %v856, 32
  %v859 = vpop.permute.xlu0 %858
  %v861 = vadd.f32 %v851, %v859
  %v862 = vtanh.pop %v861
  %864 = vrot.lane.b32.xlu0 %v862, 64
  %v865 = vpop.permute.xlu0 %864
  %v867 = vmul.f32 %v849, %v865
  %s868 = scalar_lea.vmem [#allocation2], 24
  %v869 = vld [vmem:[%s868] sm:$0xff]
  %871 = vrot.lane.b32.xlu0 %v867, 32
  %v872 = vpop.permute.xlu0 %871
  %v873 = vsel %vm352, %v872, 0
  %875 = vmatprep.subr.mxu0 0.0
  %876 = vmatpush1.msra.mxu0 0.0
  %877 = vmatprep.subr.mxu0 0.0
  %878 = vmatpush1.msra.mxu0 0.0
  %879 = vmatprep.subr.mxu0 0.0
  %880 = vmatpush1.msra.mxu0 0.0
  %881 = vmatprep.subr.mxu0 0.0
  %882 = vmatpush1.msra.mxu0 0.0
  %883 = vmatprep.subr.mxu0 0.0
  %884 = vmatpush1.msra.mxu0 0.0
  %885 = vmatprep.subr.mxu0 0.0
  %886 = vmatpush1.msra.mxu0 0.0
  %887 = vmatprep.subr.mxu0 0.0
  %888 = vmatpush1.msra.mxu0 0.0
  %889 = vmatprep.subr.mxu0 0.0
  %890 = vmatpush1.msra.mxu0 0.0
  %891 = vmatprep.subr.mxu0 0.0
  %892 = vmatpush1.msra.mxu0 0.0
  %893 = vmatprep.subr.mxu0 0.0
  %894 = vmatpush1.msra.mxu0 0.0
  %895 = vmatprep.subr.mxu0 0.0
  %896 = vmatpush1.msra.mxu0 0.0
  %897 = vmatprep.subr.mxu0 0.0
  %898 = vmatpush1.msra.mxu0 0.0
  %899 = vmatprep.subr.mxu0 0.0
  %900 = vmatpush1.msra.mxu0 %v640
  %901 = vmatprep.subr.mxu0 0.0
  %902 = vmatpush1.msra.mxu0 %v639
  %903 = vmatprep.subr.mxu0 0.0
  %904 = vmatpush1.msra.mxu0 %v638
  %905 = vmatprep.subr.mxu0 0.0
  %906 = vmatpush1.msra.mxu0 %v637
  %907 = vmatprep.subr.mxu0 0.0
  %908 = vmatpush2.msra.mxu0 0.0
  %909 = vmatprep.subr.mxu0 0.0
  %910 = vmatpush2.msra.mxu0 0.0
  %911 = vmatprep.subr.mxu0 0.0
  %912 = vmatpush2.msra.mxu0 0.0
  %913 = vmatprep.subr.mxu0 0.0
  %914 = vmatpush2.msra.mxu0 0.0
  %915 = vmatprep.subr.mxu0 0.0
  %916 = vmatpush2.msra.mxu0 0.0
  %917 = vmatprep.subr.mxu0 0.0
  %918 = vmatpush2.msra.mxu0 0.0
  %919 = vmatprep.subr.mxu0 0.0
  %920 = vmatpush2.msra.mxu0 0.0
  %921 = vmatprep.subr.mxu0 0.0
  %922 = vmatpush2.msra.mxu0 0.0
  %923 = vmatprep.subr.mxu0 0.0
  %924 = vmatpush2.msra.mxu0 0.0
  %925 = vmatprep.subr.mxu0 0.0
  %926 = vmatpush2.msra.mxu0 0.0
  %927 = vmatprep.subr.mxu0 0.0
  %928 = vmatpush2.msra.mxu0 0.0
  %929 = vmatprep.subr.mxu0 0.0
  %930 = vmatpush2.msra.mxu0 0.0
  %931 = vmatprep.subr.mxu0 0.0
  %932 = vmatpush2.msra.mxu0 0.0
  %933 = vmatprep.subr.mxu0 0.0
  %934 = vmatpush2.msra.mxu0 0.0
  %935 = vmatprep.subr.mxu0 0.0
  %936 = vmatpush2.msra.mxu0 0.0
  %937 = vmatprep.subr.mxu0 0.0
  %938 = vmatpush2.msra.mxu0 0.0
  %939 = vmatprep.mubr.f32.mxu0 0.0
  %940 = vmatmul.mubr.f32.gmra.mxu0 %v873
  %v941 = vpop.f32.mrf.mxu0
  %v942 = vadd.f32 0.0, %v941
  %v943 = vpop.f32.mrf.mxu0
  %944 = vdwg.mxu0
  %v945 = vadd.f32 %v869, %v942
  %v946 = vxor.u32 %v945, 2147483648
  %v947 = vmul.f32 %v946, 1.442695
  %v948 = vpow.pop %v947
  %v949 = vadd.f32 %v948, 1.0
  %v950 = vrcp.pop %v949
  %v951 = vmul.f32 1.0, %v950
  %v952 = vtanh.pop %v945
  %v953 = vmul.f32 %v951, %v861
  %955 = vrot.lane.b32.xlu0 %v952, 64
  %v956 = vpop.permute.xlu0 %955
  %v958 = vmul.f32 %v951, %v956
  %960 = vrot.lane.b32.xlu0 %v958, 32
  %v961 = vpop.permute.xlu0 %960
  %v963 = vadd.f32 %v953, %v961
  %v964 = vtanh.pop %v963
  %966 = vrot.lane.b32.xlu0 %v964, 64
  %v967 = vpop.permute.xlu0 %966
  %v969 = vmul.f32 %v951, %v967
  %s970 = scalar_lea.vmem [#allocation2], 32
  %v971 = vld [vmem:[%s970] sm:$0xff]
  %973 = vrot.lane.b32.xlu0 %v969, 32
  %v974 = vpop.permute.xlu0 %973
  %v975 = vsel %vm352, %v974, 0
  %977 = vmatprep.subr.mxu0 0.0
  %978 = vmatpush1.msra.mxu0 0.0
  %979 = vmatprep.subr.mxu0 0.0
  %980 = vmatpush1.msra.mxu0 0.0
  %981 = vmatprep.subr.mxu0 0.0
  %982 = vmatpush1.msra.mxu0 0.0
  %983 = vmatprep.subr.mxu0 0.0
  %984 = vmatpush1.msra.mxu0 0.0
  %985 = vmatprep.subr.mxu0 0.0
  %986 = vmatpush1.msra.mxu0 0.0
  %987 = vmatprep.subr.mxu0 0.0
  %988 = vmatpush1.msra.mxu0 0.0
  %989 = vmatprep.subr.mxu0 0.0
  %990 = vmatpush1.msra.mxu0 0.0
  %991 = vmatprep.subr.mxu0 0.0
  %992 = vmatpush1.msra.mxu0 0.0
  %993 = vmatprep.subr.mxu0 0.0
  %994 = vmatpush1.msra.mxu0 0.0
  %995 = vmatprep.subr.mxu0 0.0
  %996 = vmatpush1.msra.mxu0 0.0
  %997 = vmatprep.subr.mxu0 0.0
  %998 = vmatpush1.msra.mxu0 0.0
  %999 = vmatprep.subr.mxu0 0.0
  %1000 = vmatpush1.msra.mxu0 0.0
  %1001 = vmatprep.subr.mxu0 0.0
  %1002 = vmatpush1.msra.mxu0 %v640
  %1003 = vmatprep.subr.mxu0 0.0
  %1004 = vmatpush1.msra.mxu0 %v639
  %1005 = vmatprep.subr.mxu0 0.0
  %1006 = vmatpush1.msra.mxu0 %v638
  %1007 = vmatprep.subr.mxu0 0.0
  %1008 = vmatpush1.msra.mxu0 %v637
  %1009 = vmatprep.subr.mxu0 0.0
  %1010 = vmatpush2.msra.mxu0 0.0
  %1011 = vmatprep.subr.mxu0 0.0
  %1012 = vmatpush2.msra.mxu0 0.0
  %1013 = vmatprep.subr.mxu0 0.0
  %1014 = vmatpush2.msra.mxu0 0.0
  %1015 = vmatprep.subr.mxu0 0.0
  %1016 = vmatpush2.msra.mxu0 0.0
  %1017 = vmatprep.subr.mxu0 0.0
  %1018 = vmatpush2.msra.mxu0 0.0
  %1019 = vmatprep.subr.mxu0 0.0
  %1020 = vmatpush2.msra.mxu0 0.0
  %1021 = vmatprep.subr.mxu0 0.0
  %1022 = vmatpush2.msra.mxu0 0.0
  %1023 = vmatprep.subr.mxu0 0.0
  %1024 = vmatpush2.msra.mxu0 0.0
  %1025 = vmatprep.subr.mxu0 0.0
  %1026 = vmatpush2.msra.mxu0 0.0
  %1027 = vmatprep.subr.mxu0 0.0
  %1028 = vmatpush2.msra.mxu0 0.0
  %1029 = vmatprep.subr.mxu0 0.0
  %1030 = vmatpush2.msra.mxu0 0.0
  %1031 = vmatprep.subr.mxu0 0.0
  %1032 = vmatpush2.msra.mxu0 0.0
  %1033 = vmatprep.subr.mxu0 0.0
  %1034 = vmatpush2.msra.mxu0 0.0
  %1035 = vmatprep.subr.mxu0 0.0
  %1036 = vmatpush2.msra.mxu0 0.0
  %1037 = vmatprep.subr.mxu0 0.0
  %1038 = vmatpush2.msra.mxu0 0.0
  %1039 = vmatprep.subr.mxu0 0.0
  %1040 = vmatpush2.msra.mxu0 0.0
  %1041 = vmatprep.mubr.f32.mxu0 0.0
  %1042 = vmatmul.mubr.f32.gmra.mxu0 %v975
  %v1043 = vpop.f32.mrf.mxu0
  %v1044 = vadd.f32 0.0, %v1043
  %v1045 = vpop.f32.mrf.mxu0
  %1046 = vdwg.mxu0
  %v1047 = vadd.f32 %v971, %v1044
  %v1048 = vxor.u32 %v1047, 2147483648
  %v1049 = vmul.f32 %v1048, 1.442695
  %v1050 = vpow.pop %v1049
  %v1051 = vadd.f32 %v1050, 1.0
  %v1052 = vrcp.pop %v1051
  %v1053 = vmul.f32 1.0, %v1052
  %v1054 = vtanh.pop %v1047
  %v1055 = vmul.f32 %v1053, %v963
  %1057 = vrot.lane.b32.xlu0 %v1054, 64
  %v1058 = vpop.permute.xlu0 %1057
  %v1060 = vmul.f32 %v1053, %v1058
  %1062 = vrot.lane.b32.xlu0 %v1060, 32
  %v1063 = vpop.permute.xlu0 %1062
  %v1065 = vadd.f32 %v1055, %v1063
  %v1066 = vtanh.pop %v1065
  %1068 = vrot.lane.b32.xlu0 %v1066, 64
  %v1069 = vpop.permute.xlu0 %1068
  %v1071 = vmul.f32 %v1053, %v1069
  %s1072 = scalar_lea.vmem [#allocation2], 40
  %v1073 = vld [vmem:[%s1072] sm:$0xff]
  %1075 = vrot.lane.b32.xlu0 %v1071, 32
  %v1076 = vpop.permute.xlu0 %1075
  %v1077 = vsel %vm352, %v1076, 0
  %1079 = vmatprep.subr.mxu0 0.0
  %1080 = vmatpush1.msra.mxu0 0.0
  %1081 = vmatprep.subr.mxu0 0.0
  %1082 = vmatpush1.msra.mxu0 0.0
  %1083 = vmatprep.subr.mxu0 0.0
  %1084 = vmatpush1.msra.mxu0 0.0
  %1085 = vmatprep.subr.mxu0 0.0
  %1086 = vmatpush1.msra.mxu0 0.0
  %1087 = vmatprep.subr.mxu0 0.0
  %1088 = vmatpush1.msra.mxu0 0.0
  %1089 = vmatprep.subr.mxu0 0.0
  %1090 = vmatpush1.msra.mxu0 0.0
  %1091 = vmatprep.subr.mxu0 0.0
  %1092 = vmatpush1.msra.mxu0 0.0
  %1093 = vmatprep.subr.mxu0 0.0
  %1094 = vmatpush1.msra.mxu0 0.0
  %1095 = vmatprep.subr.mxu0 0.0
  %1096 = vmatpush1.msra.mxu0 0.0
  %1097 = vmatprep.subr.mxu0 0.0
  %1098 = vmatpush1.msra.mxu0 0.0
  %1099 = vmatprep.subr.mxu0 0.0
  %1100 = vmatpush1.msra.mxu0 0.0
  %1101 = vmatprep.subr.mxu0 0.0
  %1102 = vmatpush1.msra.mxu0 0.0
  %1103 = vmatprep.subr.mxu0 0.0
  %1104 = vmatpush1.msra.mxu0 %v640
  %1105 = vmatprep.subr.mxu0 0.0
  %1106 = vmatpush1.msra.mxu0 %v639
  %1107 = vmatprep.subr.mxu0 0.0
  %1108 = vmatpush1.msra.mxu0 %v638
  %1109 = vmatprep.subr.mxu0 0.0
  %1110 = vmatpush1.msra.mxu0 %v637
  %1111 = vmatprep.subr.mxu0 0.0
  %1112 = vmatpush2.msra.mxu0 0.0
  %1113 = vmatprep.subr.mxu0 0.0
  %1114 = vmatpush2.msra.mxu0 0.0
  %1115 = vmatprep.subr.mxu0 0.0
  %1116 = vmatpush2.msra.mxu0 0.0
  %1117 = vmatprep.subr.mxu0 0.0
  %1118 = vmatpush2.msra.mxu0 0.0
  %1119 = vmatprep.subr.mxu0 0.0
  %1120 = vmatpush2.msra.mxu0 0.0
  %1121 = vmatprep.subr.mxu0 0.0
  %1122 = vmatpush2.msra.mxu0 0.0
  %1123 = vmatprep.subr.mxu0 0.0
  %1124 = vmatpush2.msra.mxu0 0.0
  %1125 = vmatprep.subr.mxu0 0.0
  %1126 = vmatpush2.msra.mxu0 0.0
  %1127 = vmatprep.subr.mxu0 0.0
  %1128 = vmatpush2.msra.mxu0 0.0
  %1129 = vmatprep.subr.mxu0 0.0
  %1130 = vmatpush2.msra.mxu0 0.0
  %1131 = vmatprep.subr.mxu0 0.0
  %1132 = vmatpush2.msra.mxu0 0.0
  %1133 = vmatprep.subr.mxu0 0.0
  %1134 = vmatpush2.msra.mxu0 0.0
  %1135 = vmatprep.subr.mxu0 0.0
  %1136 = vmatpush2.msra.mxu0 0.0
  %1137 = vmatprep.subr.mxu0 0.0
  %1138 = vmatpush2.msra.mxu0 0.0
  %1139 = vmatprep.subr.mxu0 0.0
  %1140 = vmatpush2.msra.mxu0 0.0
  %1141 = vmatprep.subr.mxu0 0.0
  %1142 = vmatpush2.msra.mxu0 0.0
  %1143 = vmatprep.mubr.f32.mxu0 0.0
  %1144 = vmatmul.mubr.f32.gmra.mxu0 %v1077
  %v1145 = vpop.f32.mrf.mxu0
  %v1146 = vadd.f32 0.0, %v1145
  %v1147 = vpop.f32.mrf.mxu0
  %1148 = vdwg.mxu0
  %v1149 = vadd.f32 %v1073, %v1146
  %v1150 = vxor.u32 %v1149, 2147483648
  %v1151 = vmul.f32 %v1150, 1.442695
  %v1152 = vpow.pop %v1151
  %v1153 = vadd.f32 %v1152, 1.0
  %v1154 = vrcp.pop %v1153
  %v1155 = vmul.f32 1.0, %v1154
  %v1156 = vtanh.pop %v1149
  %v1157 = vmul.f32 %v1155, %v1065
  %1159 = vrot.lane.b32.xlu0 %v1156, 64
  %v1160 = vpop.permute.xlu0 %1159
  %v1162 = vmul.f32 %v1155, %v1160
  %1164 = vrot.lane.b32.xlu0 %v1162, 32
  %v1165 = vpop.permute.xlu0 %1164
  %v1167 = vadd.f32 %v1157, %v1165
  %v1168 = vtanh.pop %v1167
  %1170 = vrot.lane.b32.xlu0 %v1168, 64
  %v1171 = vpop.permute.xlu0 %1170
  %v1173 = vmul.f32 %v1155, %v1171
  %s1174 = scalar_lea.vmem [#allocation2], 48
  %v1175 = vld [vmem:[%s1174] sm:$0xff]
  %1177 = vrot.lane.b32.xlu0 %v1173, 32
  %v1178 = vpop.permute.xlu0 %1177
  %v1179 = vsel %vm352, %v1178, 0
  %1181 = vmatprep.subr.mxu0 0.0
  %1182 = vmatpush1.msra.mxu0 0.0
  %1183 = vmatprep.subr.mxu0 0.0
  %1184 = vmatpush1.msra.mxu0 0.0
  %1185 = vmatprep.subr.mxu0 0.0
  %1186 = vmatpush1.msra.mxu0 0.0
  %1187 = vmatprep.subr.mxu0 0.0
  %1188 = vmatpush1.msra.mxu0 0.0
  %1189 = vmatprep.subr.mxu0 0.0
  %1190 = vmatpush1.msra.mxu0 0.0
  %1191 = vmatprep.subr.mxu0 0.0
  %1192 = vmatpush1.msra.mxu0 0.0
  %1193 = vmatprep.subr.mxu0 0.0
  %1194 = vmatpush1.msra.mxu0 0.0
  %1195 = vmatprep.subr.mxu0 0.0
  %1196 = vmatpush1.msra.mxu0 0.0
  %1197 = vmatprep.subr.mxu0 0.0
  %1198 = vmatpush1.msra.mxu0 0.0
  %1199 = vmatprep.subr.mxu0 0.0
  %1200 = vmatpush1.msra.mxu0 0.0
  %1201 = vmatprep.subr.mxu0 0.0
  %1202 = vmatpush1.msra.mxu0 0.0
  %1203 = vmatprep.subr.mxu0 0.0
  %1204 = vmatpush1.msra.mxu0 0.0
  %1205 = vmatprep.subr.mxu0 0.0
  %1206 = vmatpush1.msra.mxu0 %v640
  %1207 = vmatprep.subr.mxu0 0.0
  %1208 = vmatpush1.msra.mxu0 %v639
  %1209 = vmatprep.subr.mxu0 0.0
  %1210 = vmatpush1.msra.mxu0 %v638
  %1211 = vmatprep.subr.mxu0 0.0
  %1212 = vmatpush1.msra.mxu0 %v637
  %1213 = vmatprep.subr.mxu0 0.0
  %1214 = vmatpush2.msra.mxu0 0.0
  %1215 = vmatprep.subr.mxu0 0.0
  %1216 = vmatpush2.msra.mxu0 0.0
  %1217 = vmatprep.subr.mxu0 0.0
  %1218 = vmatpush2.msra.mxu0 0.0
  %1219 = vmatprep.subr.mxu0 0.0
  %1220 = vmatpush2.msra.mxu0 0.0
  %1221 = vmatprep.subr.mxu0 0.0
  %1222 = vmatpush2.msra.mxu0 0.0
  %1223 = vmatprep.subr.mxu0 0.0
  %1224 = vmatpush2.msra.mxu0 0.0
  %1225 = vmatprep.subr.mxu0 0.0
  %1226 = vmatpush2.msra.mxu0 0.0
  %1227 = vmatprep.subr.mxu0 0.0
  %1228 = vmatpush2.msra.mxu0 0.0
  %1229 = vmatprep.subr.mxu0 0.0
  %1230 = vmatpush2.msra.mxu0 0.0
  %1231 = vmatprep.subr.mxu0 0.0
  %1232 = vmatpush2.msra.mxu0 0.0
  %1233 = vmatprep.subr.mxu0 0.0
  %1234 = vmatpush2.msra.mxu0 0.0
  %1235 = vmatprep.subr.mxu0 0.0
  %1236 = vmatpush2.msra.mxu0 0.0
  %1237 = vmatprep.subr.mxu0 0.0
  %1238 = vmatpush2.msra.mxu0 0.0
  %1239 = vmatprep.subr.mxu0 0.0
  %1240 = vmatpush2.msra.mxu0 0.0
  %1241 = vmatprep.subr.mxu0 0.0
  %1242 = vmatpush2.msra.mxu0 0.0
  %1243 = vmatprep.subr.mxu0 0.0
  %1244 = vmatpush2.msra.mxu0 0.0
  %1245 = vmatprep.mubr.f32.mxu0 0.0
  %1246 = vmatmul.mubr.f32.gmra.mxu0 %v1179
  %v1247 = vpop.f32.mrf.mxu0
  %v1248 = vadd.f32 0.0, %v1247
  %v1249 = vpop.f32.mrf.mxu0
  %1250 = vdwg.mxu0
  %v1251 = vadd.f32 %v1175, %v1248
  %v1252 = vxor.u32 %v1251, 2147483648
  %v1253 = vmul.f32 %v1252, 1.442695
  %v1254 = vpow.pop %v1253
  %v1255 = vadd.f32 %v1254, 1.0
  %v1256 = vrcp.pop %v1255
  %v1257 = vmul.f32 1.0, %v1256
  %v1258 = vtanh.pop %v1251
  %v1259 = vmul.f32 %v1257, %v1167
  %1261 = vrot.lane.b32.xlu0 %v1258, 64
  %v1262 = vpop.permute.xlu0 %1261
  %v1264 = vmul.f32 %v1257, %v1262
  %1266 = vrot.lane.b32.xlu0 %v1264, 32
  %v1267 = vpop.permute.xlu0 %1266
  %v1269 = vadd.f32 %v1259, %v1267
  %v1270 = vtanh.pop %v1269
  %1272 = vrot.lane.b32.xlu0 %v1270, 64
  %v1273 = vpop.permute.xlu0 %1272
  %v1275 = vmul.f32 %v1257, %v1273
  %s1276 = scalar_lea.vmem [#allocation2], 56
  %v1277 = vld [vmem:[%s1276] sm:$0xff]
  %1279 = vrot.lane.b32.xlu0 %v1275, 32
  %v1280 = vpop.permute.xlu0 %1279
  %v1281 = vsel %vm352, %v1280, 0
  %1283 = vmatprep.subr.mxu0 0.0
  %1284 = vmatpush1.msra.mxu0 0.0
  %1285 = vmatprep.subr.mxu0 0.0
  %1286 = vmatpush1.msra.mxu0 0.0
  %1287 = vmatprep.subr.mxu0 0.0
  %1288 = vmatpush1.msra.mxu0 0.0
  %1289 = vmatprep.subr.mxu0 0.0
  %1290 = vmatpush1.msra.mxu0 0.0
  %1291 = vmatprep.subr.mxu0 0.0
  %1292 = vmatpush1.msra.mxu0 0.0
  %1293 = vmatprep.subr.mxu0 0.0
  %1294 = vmatpush1.msra.mxu0 0.0
  %1295 = vmatprep.subr.mxu0 0.0
  %1296 = vmatpush1.msra.mxu0 0.0
  %1297 = vmatprep.subr.mxu0 0.0
  %1298 = vmatpush1.msra.mxu0 0.0
  %1299 = vmatprep.subr.mxu0 0.0
  %1300 = vmatpush1.msra.mxu0 0.0
  %1301 = vmatprep.subr.mxu0 0.0
  %1302 = vmatpush1.msra.mxu0 0.0
  %1303 = vmatprep.subr.mxu0 0.0
  %1304 = vmatpush1.msra.mxu0 0.0
  %1305 = vmatprep.subr.mxu0 0.0
  %1306 = vmatpush1.msra.mxu0 0.0
  %1307 = vmatprep.subr.mxu0 0.0
  %1308 = vmatpush1.msra.mxu0 %v640
  %1309 = vmatprep.subr.mxu0 0.0
  %1310 = vmatpush1.msra.mxu0 %v639
  %1311 = vmatprep.subr.mxu0 0.0
  %1312 = vmatpush1.msra.mxu0 %v638
  %1313 = vmatprep.subr.mxu0 0.0
  %1314 = vmatpush1.msra.mxu0 %v637
  %1315 = vmatprep.subr.mxu0 0.0
  %1316 = vmatpush2.msra.mxu0 0.0
  %1317 = vmatprep.subr.mxu0 0.0
  %1318 = vmatpush2.msra.mxu0 0.0
  %1319 = vmatprep.subr.mxu0 0.0
  %1320 = vmatpush2.msra.mxu0 0.0
  %1321 = vmatprep.subr.mxu0 0.0
  %1322 = vmatpush2.msra.mxu0 0.0
  %1323 = vmatprep.subr.mxu0 0.0
  %1324 = vmatpush2.msra.mxu0 0.0
  %1325 = vmatprep.subr.mxu0 0.0
  %1326 = vmatpush2.msra.mxu0 0.0
  %1327 = vmatprep.subr.mxu0 0.0
  %1328 = vmatpush2.msra.mxu0 0.0
  %1329 = vmatprep.subr.mxu0 0.0
  %1330 = vmatpush2.msra.mxu0 0.0
  %1331 = vmatprep.subr.mxu0 0.0
  %1332 = vmatpush2.msra.mxu0 0.0
  %1333 = vmatprep.subr.mxu0 0.0
  %1334 = vmatpush2.msra.mxu0 0.0
  %1335 = vmatprep.subr.mxu0 0.0
  %1336 = vmatpush2.msra.mxu0 0.0
  %1337 = vmatprep.subr.mxu0 0.0
  %1338 = vmatpush2.msra.mxu0 0.0
  %1339 = vmatprep.subr.mxu0 0.0
  %1340 = vmatpush2.msra.mxu0 0.0
  %1341 = vmatprep.subr.mxu0 0.0
  %1342 = vmatpush2.msra.mxu0 0.0
  %1343 = vmatprep.subr.mxu0 0.0
  %1344 = vmatpush2.msra.mxu0 0.0
  %1345 = vmatprep.subr.mxu0 0.0
  %1346 = vmatpush2.msra.mxu0 0.0
  %1347 = vmatprep.mubr.f32.mxu0 0.0
  %1348 = vmatmul.mubr.f32.gmra.mxu0 %v1281
  %v1349 = vpop.f32.mrf.mxu0
  %v1350 = vadd.f32 0.0, %v1349
  %v1351 = vpop.f32.mrf.mxu0
  %1352 = vdwg.mxu0
  %v1353 = vadd.f32 %v1277, %v1350
  %v1354 = vxor.u32 %v1353, 2147483648
  %v1355 = vmul.f32 %v1354, 1.442695
  %v1356 = vpow.pop %v1355
  %v1357 = vadd.f32 %v1356, 1.0
  %v1358 = vrcp.pop %v1357
  %v1359 = vmul.f32 1.0, %v1358
  %v1360 = vtanh.pop %v1353
  %v1361 = vmul.f32 %v1359, %v1269
  %1363 = vrot.lane.b32.xlu0 %v1360, 64
  %v1364 = vpop.permute.xlu0 %1363
  %v1366 = vmul.f32 %v1359, %v1364
  %1368 = vrot.lane.b32.xlu0 %v1366, 32
  %v1369 = vpop.permute.xlu0 %1368
  %v1371 = vadd.f32 %v1361, %v1369
  %v1372 = vtanh.pop %v1371
  %1374 = vrot.lane.b32.xlu0 %v1372, 64
  %v1375 = vpop.permute.xlu0 %1374
  %v1377 = vmul.f32 %v1359, %v1375
  %v1378 = vld [vmem:[%s7] sm:$0xff]
  %v1379 = vld [vmem:[%s7 + $0x8] sm:$0xff]
  %v1380 = vld [vmem:[%s7 + $0x10] sm:$0xff]
  %v1381 = vld [vmem:[%s7 + $0x18] sm:$0xff]
  %1383 = vrot.lane.b32.xlu0 %v1377, 32
  %v1384 = vpop.permute.xlu0 %1383
  %1385 = vrot.lane.b32.xlu0 %v327, 64
  %v1386 = vpop.permute.xlu0 %1385
  %v1388 = vsel %vm352, %v1384, 0
  %1390 = vmatprep.subr.mxu0 0.0
  %1391 = vmatpush1.msra.mxu0 0.0
  %1392 = vmatprep.subr.mxu0 0.0
  %1393 = vmatpush1.msra.mxu0 0.0
  %1394 = vmatprep.subr.mxu0 0.0
  %1395 = vmatpush1.msra.mxu0 0.0
  %1396 = vmatprep.subr.mxu0 0.0
  %1397 = vmatpush1.msra.mxu0 0.0
  %1398 = vmatprep.subr.mxu0 0.0
  %1399 = vmatpush1.msra.mxu0 0.0
  %1400 = vmatprep.subr.mxu0 0.0
  %1401 = vmatpush1.msra.mxu0 0.0
  %1402 = vmatprep.subr.mxu0 0.0
  %1403 = vmatpush1.msra.mxu0 0.0
  %1404 = vmatprep.subr.mxu0 0.0
  %1405 = vmatpush1.msra.mxu0 0.0
  %1406 = vmatprep.subr.mxu0 0.0
  %1407 = vmatpush1.msra.mxu0 0.0
  %1408 = vmatprep.subr.mxu0 0.0
  %1409 = vmatpush1.msra.mxu0 0.0
  %1410 = vmatprep.subr.mxu0 0.0
  %1411 = vmatpush1.msra.mxu0 0.0
  %1412 = vmatprep.subr.mxu0 0.0
  %1413 = vmatpush1.msra.mxu0 0.0
  %1414 = vmatprep.subr.mxu0 0.0
  %1415 = vmatpush1.msra.mxu0 %v1381
  %1416 = vmatprep.subr.mxu0 0.0
  %1417 = vmatpush1.msra.mxu0 %v1380
  %1418 = vmatprep.subr.mxu0 0.0
  %1419 = vmatpush1.msra.mxu0 %v1379
  %1420 = vmatprep.subr.mxu0 0.0
  %1421 = vmatpush1.msra.mxu0 %v1378
  %1422 = vmatprep.subr.mxu0 0.0
  %1423 = vmatpush2.msra.mxu0 0.0
  %1424 = vmatprep.subr.mxu0 0.0
  %1425 = vmatpush2.msra.mxu0 0.0
  %1426 = vmatprep.subr.mxu0 0.0
  %1427 = vmatpush2.msra.mxu0 0.0
  %1428 = vmatprep.subr.mxu0 0.0
  %1429 = vmatpush2.msra.mxu0 0.0
  %1430 = vmatprep.subr.mxu0 0.0
  %1431 = vmatpush2.msra.mxu0 0.0
  %1432 = vmatprep.subr.mxu0 0.0
  %1433 = vmatpush2.msra.mxu0 0.0
  %1434 = vmatprep.subr.mxu0 0.0
  %1435 = vmatpush2.msra.mxu0 0.0
  %1436 = vmatprep.subr.mxu0 0.0
  %1437 = vmatpush2.msra.mxu0 0.0
  %1438 = vmatprep.subr.mxu0 0.0
  %1439 = vmatpush2.msra.mxu0 0.0
  %1440 = vmatprep.subr.mxu0 0.0
  %1441 = vmatpush2.msra.mxu0 0.0
  %1442 = vmatprep.subr.mxu0 0.0
  %1443 = vmatpush2.msra.mxu0 0.0
  %1444 = vmatprep.subr.mxu0 0.0
  %1445 = vmatpush2.msra.mxu0 0.0
  %1446 = vmatprep.subr.mxu0 0.0
  %1447 = vmatpush2.msra.mxu0 0.0
  %1448 = vmatprep.subr.mxu0 0.0
  %1449 = vmatpush2.msra.mxu0 0.0
  %1450 = vmatprep.subr.mxu0 0.0
  %1451 = vmatpush2.msra.mxu0 0.0
  %1452 = vmatprep.subr.mxu0 0.0
  %1453 = vmatpush2.msra.mxu0 0.0
  %1454 = vmatprep.mubr.f32.mxu0 0.0
  %1455 = vmatmul.mubr.f32.gmra.mxu0 %v1388
  %v1456 = vpop.f32.mrf.mxu0
  %v1457 = vadd.f32 %v1386, %v1456
  %v1458 = vpop.f32.mrf.mxu0
  %1459 = vdwg.mxu0
  %v1460 = vmax.f32 %v1457, 0.0
  %v1461 = vld [vmem:[%s8] sm:$0xff]
  %v1462 = vld [vmem:[%s8 + $0x8] sm:$0xff]
  %v1463 = vld [vmem:[%s8 + $0x10] sm:$0xff]
  %v1464 = vld [vmem:[%s8 + $0x18] sm:$0xff]
  %1465 = vrot.lane.b32.xlu0 %v327, 32
  %v1466 = vpop.permute.xlu0 %1465
  %v1469 = vsel %vm352, %v1460, 0
  %1471 = vmatprep.subr.mxu0 0.0
  %1472 = vmatpush1.msra.mxu0 0.0
  %1473 = vmatprep.subr.mxu0 0.0
  %1474 = vmatpush1.msra.mxu0 0.0
  %1475 = vmatprep.subr.mxu0 0.0
  %1476 = vmatpush1.msra.mxu0 0.0
  %1477 = vmatprep.subr.mxu0 0.0
  %1478 = vmatpush1.msra.mxu0 0.0
  %1479 = vmatprep.subr.mxu0 0.0
  %1480 = vmatpush1.msra.mxu0 0.0
  %1481 = vmatprep.subr.mxu0 0.0
  %1482 = vmatpush1.msra.mxu0 0.0
  %1483 = vmatprep.subr.mxu0 0.0
  %1484 = vmatpush1.msra.mxu0 0.0
  %1485 = vmatprep.subr.mxu0 0.0
  %1486 = vmatpush1.msra.mxu0 0.0
  %1487 = vmatprep.subr.mxu0 0.0
  %1488 = vmatpush1.msra.mxu0 0.0
  %1489 = vmatprep.subr.mxu0 0.0
  %1490 = vmatpush1.msra.mxu0 0.0
  %1491 = vmatprep.subr.mxu0 0.0
  %1492 = vmatpush1.msra.mxu0 0.0
  %1493 = vmatprep.subr.mxu0 0.0
  %1494 = vmatpush1.msra.mxu0 0.0
  %1495 = vmatprep.subr.mxu0 0.0
  %1496 = vmatpush1.msra.mxu0 %v1464
  %1497 = vmatprep.subr.mxu0 0.0
  %1498 = vmatpush1.msra.mxu0 %v1463
  %1499 = vmatprep.subr.mxu0 0.0
  %1500 = vmatpush1.msra.mxu0 %v1462
  %1501 = vmatprep.subr.mxu0 0.0
  %1502 = vmatpush1.msra.mxu0 %v1461
  %1503 = vmatprep.subr.mxu0 0.0
  %1504 = vmatpush2.msra.mxu0 0.0
  %1505 = vmatprep.subr.mxu0 0.0
  %1506 = vmatpush2.msra.mxu0 0.0
  %1507 = vmatprep.subr.mxu0 0.0
  %1508 = vmatpush2.msra.mxu0 0.0
  %1509 = vmatprep.subr.mxu0 0.0
  %1510 = vmatpush2.msra.mxu0 0.0
  %1511 = vmatprep.subr.mxu0 0.0
  %1512 = vmatpush2.msra.mxu0 0.0
  %1513 = vmatprep.subr.mxu0 0.0
  %1514 = vmatpush2.msra.mxu0 0.0
  %1515 = vmatprep.subr.mxu0 0.0
  %1516 = vmatpush2.msra.mxu0 0.0
  %1517 = vmatprep.subr.mxu0 0.0
  %1518 = vmatpush2.msra.mxu0 0.0
  %1519 = vmatprep.subr.mxu0 0.0
  %1520 = vmatpush2.msra.mxu0 0.0
  %1521 = vmatprep.subr.mxu0 0.0
  %1522 = vmatpush2.msra.mxu0 0.0
  %1523 = vmatprep.subr.mxu0 0.0
  %1524 = vmatpush2.msra.mxu0 0.0
  %1525 = vmatprep.subr.mxu0 0.0
  %1526 = vmatpush2.msra.mxu0 0.0
  %1527 = vmatprep.subr.mxu0 0.0
  %1528 = vmatpush2.msra.mxu0 0.0
  %1529 = vmatprep.subr.mxu0 0.0
  %1530 = vmatpush2.msra.mxu0 0.0
  %1531 = vmatprep.subr.mxu0 0.0
  %1532 = vmatpush2.msra.mxu0 0.0
  %1533 = vmatprep.subr.mxu0 0.0
  %1534 = vmatpush2.msra.mxu0 0.0
  %1535 = vmatprep.mubr.f32.mxu0 0.0
  %1536 = vmatmul.mubr.f32.gmra.mxu0 %v1469
  %v1537 = vpop.f32.mrf.mxu0
  %v1538 = vadd.f32 %v1466, %v1537
  %v1539 = vpop.f32.mrf.mxu0
  %1540 = vdwg.mxu0
  %vm1541 = vcmask 64512
  %1542 = vst.msk [vmem:[%s10] sm:$0xff] %vm1541, %v1538
  // Predicated region
  $region42: #{a_call__.1} parent=0 // pred_check
    _
  $region43: #{a_call__.1} parent=0 // pred_check_branch
    %1544 = sbr.rel (0) target = $region45
  $region44: #{a_call__.1} parent=0 // pred_region
    _
  $region45: #{a_call__.1} parent=0 // pred_fallthru
    _
  // Predicated region
  $region46: #{a_call__.1} parent=0 // pred_check
    _
  $region47: #{a_call__.1} parent=0 // pred_check_branch
    %1546 = sbr.rel (0) target = $region49
  $region48: #{a_call__.1} parent=0 // pred_region
    _
  $region49: #{a_call__.1} parent=0 // pred_fallthru
    _

</llo_original>
